<compile_context>
chip_gen: v6e
topology: v6e:2x2x1
jax: 0.10.0
libtpu: 0.0.40
codegen_flags: <defaults>
</compile_context>

<pallas_src>
import math
import numpy as np
import jax
import jax.numpy as jnp
from jax.experimental import pallas as pl
from jax.experimental.pallas import tpu as pltpu


def lstm_kernel(x_ref, wih_ref, whh_ref, b_ref, wout_ref, out_ref,
                gx_ref, hs_ref, h_ref, c_ref):
    """Whole-sequence LSTM + output projection in a single invocation.

    x_ref   : [T*Bp, I]    time-major, batch-padded input (flattened)
    wih_ref : [I, 4H]      input->gates weight (pre-transposed, gate order i,f,g,o)
    whh_ref : [H, 4H]      hidden->gates weight (pre-transposed)
    b_ref   : [1, 4H]      b_ih + b_hh
    wout_ref: [H, Op]      output projection, zero-padded to lane-dense Op
    out_ref : [T*Bp, Op]   logits (padded) for all timesteps
    gx_ref  : [T*Bp, 4H]   VMEM scratch: precomputed x-gates for all timesteps
    hs_ref  : [T*Bp, H]    VMEM scratch: hidden state for all timesteps
    h_ref, c_ref : [Bp, H] VMEM scratch: recurrent state
    """
    Bp, H = h_ref.shape
    T = x_ref.shape[0] // Bp

    # ---- Phase 1: batched input projection (off the serial path) ----
    gx_ref[...] = (jnp.dot(x_ref[...], wih_ref[...],
                           preferred_element_type=jnp.float32)
                   + b_ref[...])                                     # [T*Bp, 4H]

    h_ref[...] = jnp.zeros_like(h_ref)
    c_ref[...] = jnp.zeros_like(c_ref)

    # ---- Phase 2: serial recurrence, one small matmul per step, unrolled ----
    def step(t, carry):
        row = pl.multiple_of(t * Bp, 8)               # sublane-aligned offset
        gates = gx_ref[pl.ds(row, Bp), :] + jnp.dot(
            h_ref[...], whh_ref[...], preferred_element_type=jnp.float32)  # [Bp, 4H]
        i_g = jax.nn.sigmoid(gates[:, 0 * H:1 * H])
        f_g = jax.nn.sigmoid(gates[:, 1 * H:2 * H])
        g_g = jnp.tanh(gates[:, 2 * H:3 * H])
        o_g = jax.nn.sigmoid(gates[:, 3 * H:4 * H])
        c_new = f_g * c_ref[...] + i_g * g_g
        h_new = o_g * jnp.tanh(c_new)
        c_ref[...] = c_new
        h_ref[...] = h_new
        hs_ref[pl.ds(row, Bp), :] = h_new
        return carry

    jax.lax.fori_loop(0, T, step, 0, unroll=True)

    # ---- Phase 3: batched, lane-dense output projection for all timesteps ----
    out_ref[...] = jnp.dot(hs_ref[...], wout_ref[...],
                           preferred_element_type=jnp.float32).astype(out_ref.dtype)


def lstm_all_timesteps_pallas(x_bti, w_ih, w_hh, b, w_out):
    """x_bti: [B, T, I] float32 -> padded logits [B, T, O] float32."""
    B, T, I = x_bti.shape
    H = w_hh.shape[0]
    O = w_out.shape[1]

    # Pad batch to a sublane multiple (min 8) so in-kernel dynamic slices are
    # tile-aligned; padded rows are computed and discarded (free at vreg
    # granularity since the VPU works on (8,128) tiles anyway).
    Bp = max(8, ((B + 7) // 8) * 8)
    x_pad = jnp.zeros((Bp, T, I), x_bti.dtype).at[:B].set(x_bti)
    x_flat = jnp.transpose(x_pad, (1, 0, 2)).reshape(T * Bp, I)      # time-major

    # Pad output projection to a full 128-lane width so the final store is an
    # unmasked, lane-dense vst (sliced back to O below).
    Op = max(128, ((O + 127) // 128) * 128)
    w_out_pad = jnp.zeros((H, Op), w_out.dtype).at[:, :O].set(w_out)

    out_flat = pl.pallas_call(
        lstm_kernel,
        out_shape=jax.ShapeDtypeStruct((T * Bp, Op), jnp.float32),
        grid_spec=pltpu.PrefetchScalarGridSpec(
            num_scalar_prefetch=0,
            grid=(1,),                                 # single invocation
            in_specs=[
                pl.BlockSpec((T * Bp, I), lambda i: (0, 0)),
                pl.BlockSpec((I, 4 * H), lambda i: (0, 0)),
                pl.BlockSpec((H, 4 * H), lambda i: (0, 0)),
                pl.BlockSpec((1, 4 * H), lambda i: (0, 0)),
                pl.BlockSpec((H, Op), lambda i: (0, 0)),
            ],
            out_specs=pl.BlockSpec((T * Bp, Op), lambda i: (0, 0)),
            scratch_shapes=[
                pltpu.VMEM((T * Bp, 4 * H), jnp.float32),  # gx: x-gates, all t
                pltpu.VMEM((T * Bp, H), jnp.float32),      # hs: hidden, all t
                pltpu.VMEM((Bp, H), jnp.float32),          # h state
                pltpu.VMEM((Bp, H), jnp.float32),          # c state
            ],
        ),
        compiler_params=pltpu.CompilerParams(
            dimension_semantics=("arbitrary",)),
    )(x_flat, w_ih, w_hh, b, w_out_pad)                # [T*Bp, Op]

    out_tbo = out_flat.reshape(T, Bp, Op)[:, :B, :O]   # [T, B, O]
    return jnp.transpose(out_tbo, (1, 0, 2))           # [B, T, O]


def forward(x_bti, inp_lengths, params):
    """Equivalent of LstmBpttCharAllTimesteps.forward.

    x_bti: [B, T, I], inp_lengths: python list of ints (len B).
    Returns tag_space: [sum(lengths), O].
    """
    w_ih, w_hh, b, w_out = params
    tag_padded = lstm_all_timesteps_pallas(x_bti, w_ih, w_hh, b, w_out)
    # ragged gather (glue, like torch.cat([y[:l] ...]))
    pieces = [tag_padded[bi, :int(l)] for bi, l in enumerate(inp_lengths)]
    return jnp.concatenate(pieces, axis=0)


def reference_forward(x_bti, inp_lengths, params):
    """Pure-JAX reference (lax.scan LSTM) with identical semantics."""
    w_ih, w_hh, b, w_out = params
    B, T, I = x_bti.shape
    H = w_hh.shape[0]
    x_tbi = jnp.transpose(x_bti, (1, 0, 2))

    def step(carry, x_t):
        h, c = carry
        gates = x_t @ w_ih + h @ w_hh + b[0]
        i_g = jax.nn.sigmoid(gates[:, 0 * H:1 * H])
        f_g = jax.nn.sigmoid(gates[:, 1 * H:2 * H])
        g_g = jnp.tanh(gates[:, 2 * H:3 * H])
        o_g = jax.nn.sigmoid(gates[:, 3 * H:4 * H])
        c = f_g * c + i_g * g_g
        h = o_g * jnp.tanh(c)
        return (h, c), h

    h0 = jnp.zeros((B, H), jnp.float32)
    c0 = jnp.zeros((B, H), jnp.float32)
    _, hs = jax.lax.scan(step, (h0, c0), x_tbi)       # [T, B, H]
    hs = jnp.transpose(hs, (1, 0, 2))                 # [B, T, H]
    logits = hs @ w_out                               # [B, T, O]
    pieces = [logits[bi, :int(l)] for bi, l in enumerate(inp_lengths)]
    return jnp.concatenate(pieces, axis=0)


if __name__ == "__main__":
    # Small shapes implied by the module's forward.
    B, T = 2, 8
    input_size, hidden_size, output_size = 16, 32, 10
    inp_lengths = [8, 5]   # per-sequence valid lengths (<= T)

    key = jax.random.PRNGKey(0)
    k_x, k_wih, k_whh, k_bih, k_bhh, k_out = jax.random.split(key, 6)

    # Deterministic params, PyTorch-style U(-1/sqrt(H), 1/sqrt(H)).
    bound = 1.0 / math.sqrt(hidden_size)
    # torch layout: weight_ih_l0 [4H, I], weight_hh_l0 [4H, H]; pre-transpose.
    w_ih = jax.random.uniform(k_wih, (4 * hidden_size, input_size),
                              jnp.float32, -bound, bound).T          # [I, 4H]
    w_hh = jax.random.uniform(k_whh, (4 * hidden_size, hidden_size),
                              jnp.float32, -bound, bound).T          # [H, 4H]
    b_ih = jax.random.uniform(k_bih, (4 * hidden_size,), jnp.float32, -bound, bound)
    b_hh = jax.random.uniform(k_bhh, (4 * hidden_size,), jnp.float32, -bound, bound)
    b = (b_ih + b_hh).reshape(1, 4 * hidden_size)                    # [1, 4H]
    out_bound = 1.0 / math.sqrt(hidden_size)
    w_out = jax.random.uniform(k_out, (output_size, hidden_size),
                               jnp.float32, -out_bound, out_bound).T  # [H, O]

    params = (w_ih, w_hh, b, w_out)

    x = jax.random.normal(k_x, (B, T, input_size), jnp.float32)

    tag_space = forward(x, inp_lengths, params)
    tag_space = jax.block_until_ready(tag_space)

    assert tag_space.shape == (sum(inp_lengths), output_size), tag_space.shape

    ref = jax.block_until_ready(reference_forward(x, inp_lengths, params))
    np.testing.assert_allclose(np.asarray(tag_space), np.asarray(ref),
                               rtol=1e-5, atol=2e-5)

    print("KERNEL_OK")
</pallas_src>

<mosaic_0001>
module attributes {stable_mosaic.version = 11 : i64} {
  func.func @lstm_kernel(%arg0: i32, %arg1: memref<64x16xf32, #tpu.memory_space<vmem>>, %arg2: memref<16x128xf32, #tpu.memory_space<vmem>>, %arg3: memref<32x128xf32, #tpu.memory_space<vmem>>, %arg4: memref<1x128xf32, #tpu.memory_space<vmem>>, %arg5: memref<32x128xf32, #tpu.memory_space<vmem>>, %arg6: memref<64x128xf32, #tpu.memory_space<vmem>>, %arg7: memref<64x128xf32, #tpu.memory_space<vmem>>, %arg8: memref<64x32xf32, #tpu.memory_space<vmem>>, %arg9: memref<8x32xf32, #tpu.memory_space<vmem>>, %arg10: memref<8x32xf32, #tpu.memory_space<vmem>>) attributes {dimension_semantics = [#tpu.dimension_semantics<arbitrary>], iteration_bounds = array<i64: 1>, scalar_prefetch = 0 : i64, scratch_operands = 4 : i64, tpu.core_type = #tpu.core_type<tc>, window_params = [{pipeline_mode = #tpu.pipeline_mode<synchronous>, transform_indices = @transform_0, window_bounds = array<i64: 64, 16>}, {pipeline_mode = #tpu.pipeline_mode<synchronous>, transform_indices = @transform_1, window_bounds = array<i64: 16, 128>}, {pipeline_mode = #tpu.pipeline_mode<synchronous>, transform_indices = @transform_2, window_bounds = array<i64: 32, 128>}, {pipeline_mode = #tpu.pipeline_mode<synchronous>, transform_indices = @transform_3, window_bounds = array<i64: 1, 128>}, {pipeline_mode = #tpu.pipeline_mode<synchronous>, transform_indices = @transform_4, window_bounds = array<i64: 32, 128>}, {pipeline_mode = #tpu.pipeline_mode<synchronous>, transform_indices = @transform_5, window_bounds = array<i64: 64, 128>}]} {
    %c0 = arith.constant 0 : index
    %c0_0 = arith.constant 0 : index
    %0 = vector.load %arg1[%c0, %c0_0] : memref<64x16xf32, #tpu.memory_space<vmem>>, vector<64x16xf32>
    %c0_1 = arith.constant 0 : index
    %c0_2 = arith.constant 0 : index
    %1 = vector.load %arg2[%c0_1, %c0_2] : memref<16x128xf32, #tpu.memory_space<vmem>>, vector<16x128xf32>
    %cst = arith.constant dense<0.000000e+00> : vector<64x128xf32>
    %2 = tpu.matmul %0, %1, %cst {dimension_numbers = #tpu.dot_dimension_numbers<[1], [0], [0], [1], [0, 0, 1, 1], [], []>} : vector<64x16xf32>, vector<16x128xf32>, vector<64x128xf32> -> vector<64x128xf32>
    %c0_3 = arith.constant 0 : index
    %c0_4 = arith.constant 0 : index
    %3 = vector.load %arg4[%c0_3, %c0_4] : memref<1x128xf32, #tpu.memory_space<vmem>>, vector<1x128xf32>
    %4 = vector.broadcast %3 : vector<1x128xf32> to vector<64x128xf32>
    %5 = arith.addf %2, %4 : vector<64x128xf32>
    %c0_5 = arith.constant 0 : index
    %c0_6 = arith.constant 0 : index
    %6 = vector.load %arg7[%c0_5, %c0_6] : memref<64x128xf32, #tpu.memory_space<vmem>>, vector<64x128xf32>
    tpu.vector_store %arg7[%c0_5, %c0_6], %5 {strides = array<i32>} : memref<64x128xf32, #tpu.memory_space<vmem>>, vector<64x128xf32>,
    %cst_7 = arith.constant 0.000000e+00 : f32
    %7 = vector.broadcast %cst_7 : f32 to vector<8x32xf32>
    %c0_8 = arith.constant 0 : index
    %c0_9 = arith.constant 0 : index
    %8 = vector.load %arg9[%c0_8, %c0_9] : memref<8x32xf32, #tpu.memory_space<vmem>>, vector<8x32xf32>
    tpu.vector_store %arg9[%c0_8, %c0_9], %7 {strides = array<i32>} : memref<8x32xf32, #tpu.memory_space<vmem>>, vector<8x32xf32>,
    %cst_10 = arith.constant 0.000000e+00 : f32
    %9 = vector.broadcast %cst_10 : f32 to vector<8x32xf32>
    %c0_11 = arith.constant 0 : index
    %c0_12 = arith.constant 0 : index
    %10 = vector.load %arg10[%c0_11, %c0_12] : memref<8x32xf32, #tpu.memory_space<vmem>>, vector<8x32xf32>
    tpu.vector_store %arg10[%c0_11, %c0_12], %9 {strides = array<i32>} : memref<8x32xf32, #tpu.memory_space<vmem>>, vector<8x32xf32>,
    %c0_i32 = arith.constant 0 : i32
    %c8_i32 = arith.constant 8 : i32
    %11 = arith.muli %c0_i32, %c8_i32 : i32
    %12 = tpu.assume_multiple %11, 8 : i32
    %13 = arith.index_cast %12 : i32 to index
    %c0_13 = arith.constant 0 : index
    %14 = vector.load %arg7[%13, %c0_13] : memref<64x128xf32, #tpu.memory_space<vmem>>, vector<8x128xf32>
    %c0_14 = arith.constant 0 : index
    %c0_15 = arith.constant 0 : index
    %15 = vector.load %arg9[%c0_14, %c0_15] : memref<8x32xf32, #tpu.memory_space<vmem>>, vector<8x32xf32>
    %c0_16 = arith.constant 0 : index
    %c0_17 = arith.constant 0 : index
    %16 = vector.load %arg3[%c0_16, %c0_17] : memref<32x128xf32, #tpu.memory_space<vmem>>, vector<32x128xf32>
    %cst_18 = arith.constant dense<0.000000e+00> : vector<8x128xf32>
    %17 = tpu.matmul %15, %16, %cst_18 {dimension_numbers = #tpu.dot_dimension_numbers<[1], [0], [0], [1], [0, 0, 1, 1], [], []>} : vector<8x32xf32>, vector<32x128xf32>, vector<8x128xf32> -> vector<8x128xf32>
    %18 = arith.addf %14, %17 : vector<8x128xf32>
    %19 = vector.extract_strided_slice %18 {offsets = [0, 0], sizes = [8, 32], strides = [1, 1]} : vector<8x128xf32> to vector<8x32xf32>
    %20 = arith.negf %19 : vector<8x32xf32>
    %21 = math.exp %20 : vector<8x32xf32>
    %cst_19 = arith.constant 1.000000e+00 : f32
    %22 = vector.broadcast %cst_19 : f32 to vector<8x32xf32>
    %23 = arith.addf %22, %21 : vector<8x32xf32>
    %24 = arith.divf %22, %23 : vector<8x32xf32>
    %25 = vector.extract_strided_slice %18 {offsets = [0, 32], sizes = [8, 32], strides = [1, 1]} : vector<8x128xf32> to vector<8x32xf32>
    %26 = arith.negf %25 : vector<8x32xf32>
    %27 = math.exp %26 : vector<8x32xf32>
    %cst_20 = arith.constant 1.000000e+00 : f32
    %28 = vector.broadcast %cst_20 : f32 to vector<8x32xf32>
    %29 = arith.addf %28, %27 : vector<8x32xf32>
    %30 = arith.divf %28, %29 : vector<8x32xf32>
    %31 = vector.extract_strided_slice %18 {offsets = [0, 64], sizes = [8, 32], strides = [1, 1]} : vector<8x128xf32> to vector<8x32xf32>
    %32 = math.tanh %31 : vector<8x32xf32>
    %33 = vector.extract_strided_slice %18 {offsets = [0, 96], sizes = [8, 32], strides = [1, 1]} : vector<8x128xf32> to vector<8x32xf32>
    %34 = arith.negf %33 : vector<8x32xf32>
    %35 = math.exp %34 : vector<8x32xf32>
    %cst_21 = arith.constant 1.000000e+00 : f32
    %36 = vector.broadcast %cst_21 : f32 to vector<8x32xf32>
    %37 = arith.addf %36, %35 : vector<8x32xf32>
    %38 = arith.divf %36, %37 : vector<8x32xf32>
    %c0_22 = arith.constant 0 : index
    %c0_23 = arith.constant 0 : index
    %39 = vector.load %arg10[%c0_22, %c0_23] : memref<8x32xf32, #tpu.memory_space<vmem>>, vector<8x32xf32>
    %40 = arith.mulf %30, %39 : vector<8x32xf32>
    %41 = arith.mulf %24, %32 : vector<8x32xf32>
    %42 = arith.addf %40, %41 : vector<8x32xf32>
    %43 = math.tanh %42 : vector<8x32xf32>
    %44 = arith.mulf %38, %43 : vector<8x32xf32>
    %c0_24 = arith.constant 0 : index
    %c0_25 = arith.constant 0 : index
    %45 = vector.load %arg10[%c0_24, %c0_25] : memref<8x32xf32, #tpu.memory_space<vmem>>, vector<8x32xf32>
    tpu.vector_store %arg10[%c0_24, %c0_25], %42 {strides = array<i32>} : memref<8x32xf32, #tpu.memory_space<vmem>>, vector<8x32xf32>,
    %c0_26 = arith.constant 0 : index
    %c0_27 = arith.constant 0 : index
    %46 = vector.load %arg9[%c0_26, %c0_27] : memref<8x32xf32, #tpu.memory_space<vmem>>, vector<8x32xf32>
    tpu.vector_store %arg9[%c0_26, %c0_27], %44 {strides = array<i32>} : memref<8x32xf32, #tpu.memory_space<vmem>>, vector<8x32xf32>,
    %47 = arith.index_cast %12 : i32 to index
    %c0_28 = arith.constant 0 : index
    %48 = vector.load %arg8[%47, %c0_28] : memref<64x32xf32, #tpu.memory_space<vmem>>, vector<8x32xf32>
    tpu.vector_store %arg8[%47, %c0_28], %44 {strides = array<i32>} : memref<64x32xf32, #tpu.memory_space<vmem>>, vector<8x32xf32>,
    %c1_i32 = arith.constant 1 : i32
    %c8_i32_29 = arith.constant 8 : i32
    %49 = arith.muli %c1_i32, %c8_i32_29 : i32
    %50 = tpu.assume_multiple %49, 8 : i32
    %51 = arith.index_cast %50 : i32 to index
    %c0_30 = arith.constant 0 : index
    %52 = vector.load %arg7[%51, %c0_30] : memref<64x128xf32, #tpu.memory_space<vmem>>, vector<8x128xf32>
    %c0_31 = arith.constant 0 : index
    %c0_32 = arith.constant 0 : index
    %53 = vector.load %arg9[%c0_31, %c0_32] : memref<8x32xf32, #tpu.memory_space<vmem>>, vector<8x32xf32>
    %c0_33 = arith.constant 0 : index
    %c0_34 = arith.constant 0 : index
    %54 = vector.load %arg3[%c0_33, %c0_34] : memref<32x128xf32, #tpu.memory_space<vmem>>, vector<32x128xf32>
    %cst_35 = arith.constant dense<0.000000e+00> : vector<8x128xf32>
    %55 = tpu.matmul %53, %54, %cst_35 {dimension_numbers = #tpu.dot_dimension_numbers<[1], [0], [0], [1], [0, 0, 1, 1], [], []>} : vector<8x32xf32>, vector<32x128xf32>, vector<8x128xf32> -> vector<8x128xf32>
    %56 = arith.addf %52, %55 : vector<8x128xf32>
    %57 = vector.extract_strided_slice %56 {offsets = [0, 0], sizes = [8, 32], strides = [1, 1]} : vector<8x128xf32> to vector<8x32xf32>
    %58 = arith.negf %57 : vector<8x32xf32>
    %59 = math.exp %58 : vector<8x32xf32>
    %cst_36 = arith.constant 1.000000e+00 : f32
    %60 = vector.broadcast %cst_36 : f32 to vector<8x32xf32>
    %61 = arith.addf %60, %59 : vector<8x32xf32>
    %62 = arith.divf %60, %61 : vector<8x32xf32>
    %63 = vector.extract_strided_slice %56 {offsets = [0, 32], sizes = [8, 32], strides = [1, 1]} : vector<8x128xf32> to vector<8x32xf32>
    %64 = arith.negf %63 : vector<8x32xf32>
    %65 = math.exp %64 : vector<8x32xf32>
    %cst_37 = arith.constant 1.000000e+00 : f32
    %66 = vector.broadcast %cst_37 : f32 to vector<8x32xf32>
    %67 = arith.addf %66, %65 : vector<8x32xf32>
    %68 = arith.divf %66, %67 : vector<8x32xf32>
    %69 = vector.extract_strided_slice %56 {offsets = [0, 64], sizes = [8, 32], strides = [1, 1]} : vector<8x128xf32> to vector<8x32xf32>
    %70 = math.tanh %69 : vector<8x32xf32>
    %71 = vector.extract_strided_slice %56 {offsets = [0, 96], sizes = [8, 32], strides = [1, 1]} : vector<8x128xf32> to vector<8x32xf32>
    %72 = arith.negf %71 : vector<8x32xf32>
    %73 = math.exp %72 : vector<8x32xf32>
    %cst_38 = arith.constant 1.000000e+00 : f32
    %74 = vector.broadcast %cst_38 : f32 to vector<8x32xf32>
    %75 = arith.addf %74, %73 : vector<8x32xf32>
    %76 = arith.divf %74, %75 : vector<8x32xf32>
    %c0_39 = arith.constant 0 : index
    %c0_40 = arith.constant 0 : index
    %77 = vector.load %arg10[%c0_39, %c0_40] : memref<8x32xf32, #tpu.memory_space<vmem>>, vector<8x32xf32>
    %78 = arith.mulf %68, %77 : vector<8x32xf32>
    %79 = arith.mulf %62, %70 : vector<8x32xf32>
    %80 = arith.addf %78, %79 : vector<8x32xf32>
    %81 = math.tanh %80 : vector<8x32xf32>
    %82 = arith.mulf %76, %81 : vector<8x32xf32>
    %c0_41 = arith.constant 0 : index
    %c0_42 = arith.constant 0 : index
    %83 = vector.load %arg10[%c0_41, %c0_42] : memref<8x32xf32, #tpu.memory_space<vmem>>, vector<8x32xf32>
    tpu.vector_store %arg10[%c0_41, %c0_42], %80 {strides = array<i32>} : memref<8x32xf32, #tpu.memory_space<vmem>>, vector<8x32xf32>,
    %c0_43 = arith.constant 0 : index
    %c0_44 = arith.constant 0 : index
    %84 = vector.load %arg9[%c0_43, %c0_44] : memref<8x32xf32, #tpu.memory_space<vmem>>, vector<8x32xf32>
    tpu.vector_store %arg9[%c0_43, %c0_44], %82 {strides = array<i32>} : memref<8x32xf32, #tpu.memory_space<vmem>>, vector<8x32xf32>,
    %85 = arith.index_cast %50 : i32 to index
    %c0_45 = arith.constant 0 : index
    %86 = vector.load %arg8[%85, %c0_45] : memref<64x32xf32, #tpu.memory_space<vmem>>, vector<8x32xf32>
    tpu.vector_store %arg8[%85, %c0_45], %82 {strides = array<i32>} : memref<64x32xf32, #tpu.memory_space<vmem>>, vector<8x32xf32>,
    %c2_i32 = arith.constant 2 : i32
    %c8_i32_46 = arith.constant 8 : i32
    %87 = arith.muli %c2_i32, %c8_i32_46 : i32
    %88 = tpu.assume_multiple %87, 8 : i32
    %89 = arith.index_cast %88 : i32 to index
    %c0_47 = arith.constant 0 : index
    %90 = vector.load %arg7[%89, %c0_47] : memref<64x128xf32, #tpu.memory_space<vmem>>, vector<8x128xf32>
    %c0_48 = arith.constant 0 : index
    %c0_49 = arith.constant 0 : index
    %91 = vector.load %arg9[%c0_48, %c0_49] : memref<8x32xf32, #tpu.memory_space<vmem>>, vector<8x32xf32>
    %c0_50 = arith.constant 0 : index
    %c0_51 = arith.constant 0 : index
    %92 = vector.load %arg3[%c0_50, %c0_51] : memref<32x128xf32, #tpu.memory_space<vmem>>, vector<32x128xf32>
    %cst_52 = arith.constant dense<0.000000e+00> : vector<8x128xf32>
    %93 = tpu.matmul %91, %92, %cst_52 {dimension_numbers = #tpu.dot_dimension_numbers<[1], [0], [0], [1], [0, 0, 1, 1], [], []>} : vector<8x32xf32>, vector<32x128xf32>, vector<8x128xf32> -> vector<8x128xf32>
    %94 = arith.addf %90, %93 : vector<8x128xf32>
    %95 = vector.extract_strided_slice %94 {offsets = [0, 0], sizes = [8, 32], strides = [1, 1]} : vector<8x128xf32> to vector<8x32xf32>
    %96 = arith.negf %95 : vector<8x32xf32>
    %97 = math.exp %96 : vector<8x32xf32>
    %cst_53 = arith.constant 1.000000e+00 : f32
    %98 = vector.broadcast %cst_53 : f32 to vector<8x32xf32>
    %99 = arith.addf %98, %97 : vector<8x32xf32>
    %100 = arith.divf %98, %99 : vector<8x32xf32>
    %101 = vector.extract_strided_slice %94 {offsets = [0, 32], sizes = [8, 32], strides = [1, 1]} : vector<8x128xf32> to vector<8x32xf32>
    %102 = arith.negf %101 : vector<8x32xf32>
    %103 = math.exp %102 : vector<8x32xf32>
    %cst_54 = arith.constant 1.000000e+00 : f32
    %104 = vector.broadcast %cst_54 : f32 to vector<8x32xf32>
    %105 = arith.addf %104, %103 : vector<8x32xf32>
    %106 = arith.divf %104, %105 : vector<8x32xf32>
    %107 = vector.extract_strided_slice %94 {offsets = [0, 64], sizes = [8, 32], strides = [1, 1]} : vector<8x128xf32> to vector<8x32xf32>
    %108 = math.tanh %107 : vector<8x32xf32>
    %109 = vector.extract_strided_slice %94 {offsets = [0, 96], sizes = [8, 32], strides = [1, 1]} : vector<8x128xf32> to vector<8x32xf32>
    %110 = arith.negf %109 : vector<8x32xf32>
    %111 = math.exp %110 : vector<8x32xf32>
    %cst_55 = arith.constant 1.000000e+00 : f32
    %112 = vector.broadcast %cst_55 : f32 to vector<8x32xf32>
    %113 = arith.addf %112, %111 : vector<8x32xf32>
    %114 = arith.divf %112, %113 : vector<8x32xf32>
    %c0_56 = arith.constant 0 : index
    %c0_57 = arith.constant 0 : index
    %115 = vector.load %arg10[%c0_56, %c0_57] : memref<8x32xf32, #tpu.memory_space<vmem>>, vector<8x32xf32>
    %116 = arith.mulf %106, %115 : vector<8x32xf32>
    %117 = arith.mulf %100, %108 : vector<8x32xf32>
    %118 = arith.addf %116, %117 : vector<8x32xf32>
    %119 = math.tanh %118 : vector<8x32xf32>
    %120 = arith.mulf %114, %119 : vector<8x32xf32>
    %c0_58 = arith.constant 0 : index
    %c0_59 = arith.constant 0 : index
    %121 = vector.load %arg10[%c0_58, %c0_59] : memref<8x32xf32, #tpu.memory_space<vmem>>, vector<8x32xf32>
    tpu.vector_store %arg10[%c0_58, %c0_59], %118 {strides = array<i32>} : memref<8x32xf32, #tpu.memory_space<vmem>>, vector<8x32xf32>,
    %c0_60 = arith.constant 0 : index
    %c0_61 = arith.constant 0 : index
    %122 = vector.load %arg9[%c0_60, %c0_61] : memref<8x32xf32, #tpu.memory_space<vmem>>, vector<8x32xf32>
    tpu.vector_store %arg9[%c0_60, %c0_61], %120 {strides = array<i32>} : memref<8x32xf32, #tpu.memory_space<vmem>>, vector<8x32xf32>,
    %123 = arith.index_cast %88 : i32 to index
    %c0_62 = arith.constant 0 : index
    %124 = vector.load %arg8[%123, %c0_62] : memref<64x32xf32, #tpu.memory_space<vmem>>, vector<8x32xf32>
    tpu.vector_store %arg8[%123, %c0_62], %120 {strides = array<i32>} : memref<64x32xf32, #tpu.memory_space<vmem>>, vector<8x32xf32>,
    %c3_i32 = arith.constant 3 : i32
    %c8_i32_63 = arith.constant 8 : i32
    %125 = arith.muli %c3_i32, %c8_i32_63 : i32
    %126 = tpu.assume_multiple %125, 8 : i32
    %127 = arith.index_cast %126 : i32 to index
    %c0_64 = arith.constant 0 : index
    %128 = vector.load %arg7[%127, %c0_64] : memref<64x128xf32, #tpu.memory_space<vmem>>, vector<8x128xf32>
    %c0_65 = arith.constant 0 : index
    %c0_66 = arith.constant 0 : index
    %129 = vector.load %arg9[%c0_65, %c0_66] : memref<8x32xf32, #tpu.memory_space<vmem>>, vector<8x32xf32>
    %c0_67 = arith.constant 0 : index
    %c0_68 = arith.constant 0 : index
    %130 = vector.load %arg3[%c0_67, %c0_68] : memref<32x128xf32, #tpu.memory_space<vmem>>, vector<32x128xf32>
    %cst_69 = arith.constant dense<0.000000e+00> : vector<8x128xf32>
    %131 = tpu.matmul %129, %130, %cst_69 {dimension_numbers = #tpu.dot_dimension_numbers<[1], [0], [0], [1], [0, 0, 1, 1], [], []>} : vector<8x32xf32>, vector<32x128xf32>, vector<8x128xf32> -> vector<8x128xf32>
    %132 = arith.addf %128, %131 : vector<8x128xf32>
    %133 = vector.extract_strided_slice %132 {offsets = [0, 0], sizes = [8, 32], strides = [1, 1]} : vector<8x128xf32> to vector<8x32xf32>
    %134 = arith.negf %133 : vector<8x32xf32>
    %135 = math.exp %134 : vector<8x32xf32>
    %cst_70 = arith.constant 1.000000e+00 : f32
    %136 = vector.broadcast %cst_70 : f32 to vector<8x32xf32>
    %137 = arith.addf %136, %135 : vector<8x32xf32>
    %138 = arith.divf %136, %137 : vector<8x32xf32>
    %139 = vector.extract_strided_slice %132 {offsets = [0, 32], sizes = [8, 32], strides = [1, 1]} : vector<8x128xf32> to vector<8x32xf32>
    %140 = arith.negf %139 : vector<8x32xf32>
    %141 = math.exp %140 : vector<8x32xf32>
    %cst_71 = arith.constant 1.000000e+00 : f32
    %142 = vector.broadcast %cst_71 : f32 to vector<8x32xf32>
    %143 = arith.addf %142, %141 : vector<8x32xf32>
    %144 = arith.divf %142, %143 : vector<8x32xf32>
    %145 = vector.extract_strided_slice %132 {offsets = [0, 64], sizes = [8, 32], strides = [1, 1]} : vector<8x128xf32> to vector<8x32xf32>
    %146 = math.tanh %145 : vector<8x32xf32>
    %147 = vector.extract_strided_slice %132 {offsets = [0, 96], sizes = [8, 32], strides = [1, 1]} : vector<8x128xf32> to vector<8x32xf32>
    %148 = arith.negf %147 : vector<8x32xf32>
    %149 = math.exp %148 : vector<8x32xf32>
    %cst_72 = arith.constant 1.000000e+00 : f32
    %150 = vector.broadcast %cst_72 : f32 to vector<8x32xf32>
    %151 = arith.addf %150, %149 : vector<8x32xf32>
    %152 = arith.divf %150, %151 : vector<8x32xf32>
    %c0_73 = arith.constant 0 : index
    %c0_74 = arith.constant 0 : index
    %153 = vector.load %arg10[%c0_73, %c0_74] : memref<8x32xf32, #tpu.memory_space<vmem>>, vector<8x32xf32>
    %154 = arith.mulf %144, %153 : vector<8x32xf32>
    %155 = arith.mulf %138, %146 : vector<8x32xf32>
    %156 = arith.addf %154, %155 : vector<8x32xf32>
    %157 = math.tanh %156 : vector<8x32xf32>
    %158 = arith.mulf %152, %157 : vector<8x32xf32>
    %c0_75 = arith.constant 0 : index
    %c0_76 = arith.constant 0 : index
    %159 = vector.load %arg10[%c0_75, %c0_76] : memref<8x32xf32, #tpu.memory_space<vmem>>, vector<8x32xf32>
    tpu.vector_store %arg10[%c0_75, %c0_76], %156 {strides = array<i32>} : memref<8x32xf32, #tpu.memory_space<vmem>>, vector<8x32xf32>,
    %c0_77 = arith.constant 0 : index
    %c0_78 = arith.constant 0 : index
    %160 = vector.load %arg9[%c0_77, %c0_78] : memref<8x32xf32, #tpu.memory_space<vmem>>, vector<8x32xf32>
    tpu.vector_store %arg9[%c0_77, %c0_78], %158 {strides = array<i32>} : memref<8x32xf32, #tpu.memory_space<vmem>>, vector<8x32xf32>,
    %161 = arith.index_cast %126 : i32 to index
    %c0_79 = arith.constant 0 : index
    %162 = vector.load %arg8[%161, %c0_79] : memref<64x32xf32, #tpu.memory_space<vmem>>, vector<8x32xf32>
    tpu.vector_store %arg8[%161, %c0_79], %158 {strides = array<i32>} : memref<64x32xf32, #tpu.memory_space<vmem>>, vector<8x32xf32>,
    %c4_i32 = arith.constant 4 : i32
    %c8_i32_80 = arith.constant 8 : i32
    %163 = arith.muli %c4_i32, %c8_i32_80 : i32
    %164 = tpu.assume_multiple %163, 8 : i32
    %165 = arith.index_cast %164 : i32 to index
    %c0_81 = arith.constant 0 : index
    %166 = vector.load %arg7[%165, %c0_81] : memref<64x128xf32, #tpu.memory_space<vmem>>, vector<8x128xf32>
    %c0_82 = arith.constant 0 : index
    %c0_83 = arith.constant 0 : index
    %167 = vector.load %arg9[%c0_82, %c0_83] : memref<8x32xf32, #tpu.memory_space<vmem>>, vector<8x32xf32>
    %c0_84 = arith.constant 0 : index
    %c0_85 = arith.constant 0 : index
    %168 = vector.load %arg3[%c0_84, %c0_85] : memref<32x128xf32, #tpu.memory_space<vmem>>, vector<32x128xf32>
    %cst_86 = arith.constant dense<0.000000e+00> : vector<8x128xf32>
    %169 = tpu.matmul %167, %168, %cst_86 {dimension_numbers = #tpu.dot_dimension_numbers<[1], [0], [0], [1], [0, 0, 1, 1], [], []>} : vector<8x32xf32>, vector<32x128xf32>, vector<8x128xf32> -> vector<8x128xf32>
    %170 = arith.addf %166, %169 : vector<8x128xf32>
    %171 = vector.extract_strided_slice %170 {offsets = [0, 0], sizes = [8, 32], strides = [1, 1]} : vector<8x128xf32> to vector<8x32xf32>
    %172 = arith.negf %171 : vector<8x32xf32>
    %173 = math.exp %172 : vector<8x32xf32>
    %cst_87 = arith.constant 1.000000e+00 : f32
    %174 = vector.broadcast %cst_87 : f32 to vector<8x32xf32>
    %175 = arith.addf %174, %173 : vector<8x32xf32>
    %176 = arith.divf %174, %175 : vector<8x32xf32>
    %177 = vector.extract_strided_slice %170 {offsets = [0, 32], sizes = [8, 32], strides = [1, 1]} : vector<8x128xf32> to vector<8x32xf32>
    %178 = arith.negf %177 : vector<8x32xf32>
    %179 = math.exp %178 : vector<8x32xf32>
    %cst_88 = arith.constant 1.000000e+00 : f32
    %180 = vector.broadcast %cst_88 : f32 to vector<8x32xf32>
    %181 = arith.addf %180, %179 : vector<8x32xf32>
    %182 = arith.divf %180, %181 : vector<8x32xf32>
    %183 = vector.extract_strided_slice %170 {offsets = [0, 64], sizes = [8, 32], strides = [1, 1]} : vector<8x128xf32> to vector<8x32xf32>
    %184 = math.tanh %183 : vector<8x32xf32>
    %185 = vector.extract_strided_slice %170 {offsets = [0, 96], sizes = [8, 32], strides = [1, 1]} : vector<8x128xf32> to vector<8x32xf32>
    %186 = arith.negf %185 : vector<8x32xf32>
    %187 = math.exp %186 : vector<8x32xf32>
    %cst_89 = arith.constant 1.000000e+00 : f32
    %188 = vector.broadcast %cst_89 : f32 to vector<8x32xf32>
    %189 = arith.addf %188, %187 : vector<8x32xf32>
    %190 = arith.divf %188, %189 : vector<8x32xf32>
    %c0_90 = arith.constant 0 : index
    %c0_91 = arith.constant 0 : index
    %191 = vector.load %arg10[%c0_90, %c0_91] : memref<8x32xf32, #tpu.memory_space<vmem>>, vector<8x32xf32>
    %192 = arith.mulf %182, %191 : vector<8x32xf32>
    %193 = arith.mulf %176, %184 : vector<8x32xf32>
    %194 = arith.addf %192, %193 : vector<8x32xf32>
    %195 = math.tanh %194 : vector<8x32xf32>
    %196 = arith.mulf %190, %195 : vector<8x32xf32>
    %c0_92 = arith.constant 0 : index
    %c0_93 = arith.constant 0 : index
    %197 = vector.load %arg10[%c0_92, %c0_93] : memref<8x32xf32, #tpu.memory_space<vmem>>, vector<8x32xf32>
    tpu.vector_store %arg10[%c0_92, %c0_93], %194 {strides = array<i32>} : memref<8x32xf32, #tpu.memory_space<vmem>>, vector<8x32xf32>,
    %c0_94 = arith.constant 0 : index
    %c0_95 = arith.constant 0 : index
    %198 = vector.load %arg9[%c0_94, %c0_95] : memref<8x32xf32, #tpu.memory_space<vmem>>, vector<8x32xf32>
    tpu.vector_store %arg9[%c0_94, %c0_95], %196 {strides = array<i32>} : memref<8x32xf32, #tpu.memory_space<vmem>>, vector<8x32xf32>,
    %199 = arith.index_cast %164 : i32 to index
    %c0_96 = arith.constant 0 : index
    %200 = vector.load %arg8[%199, %c0_96] : memref<64x32xf32, #tpu.memory_space<vmem>>, vector<8x32xf32>
    tpu.vector_store %arg8[%199, %c0_96], %196 {strides = array<i32>} : memref<64x32xf32, #tpu.memory_space<vmem>>, vector<8x32xf32>,
    %c5_i32 = arith.constant 5 : i32
    %c8_i32_97 = arith.constant 8 : i32
    %201 = arith.muli %c5_i32, %c8_i32_97 : i32
    %202 = tpu.assume_multiple %201, 8 : i32
    %203 = arith.index_cast %202 : i32 to index
    %c0_98 = arith.constant 0 : index
    %204 = vector.load %arg7[%203, %c0_98] : memref<64x128xf32, #tpu.memory_space<vmem>>, vector<8x128xf32>
    %c0_99 = arith.constant 0 : index
    %c0_100 = arith.constant 0 : index
    %205 = vector.load %arg9[%c0_99, %c0_100] : memref<8x32xf32, #tpu.memory_space<vmem>>, vector<8x32xf32>
    %c0_101 = arith.constant 0 : index
    %c0_102 = arith.constant 0 : index
    %206 = vector.load %arg3[%c0_101, %c0_102] : memref<32x128xf32, #tpu.memory_space<vmem>>, vector<32x128xf32>
    %cst_103 = arith.constant dense<0.000000e+00> : vector<8x128xf32>
    %207 = tpu.matmul %205, %206, %cst_103 {dimension_numbers = #tpu.dot_dimension_numbers<[1], [0], [0], [1], [0, 0, 1, 1], [], []>} : vector<8x32xf32>, vector<32x128xf32>, vector<8x128xf32> -> vector<8x128xf32>
    %208 = arith.addf %204, %207 : vector<8x128xf32>
    %209 = vector.extract_strided_slice %208 {offsets = [0, 0], sizes = [8, 32], strides = [1, 1]} : vector<8x128xf32> to vector<8x32xf32>
    %210 = arith.negf %209 : vector<8x32xf32>
    %211 = math.exp %210 : vector<8x32xf32>
    %cst_104 = arith.constant 1.000000e+00 : f32
    %212 = vector.broadcast %cst_104 : f32 to vector<8x32xf32>
    %213 = arith.addf %212, %211 : vector<8x32xf32>
    %214 = arith.divf %212, %213 : vector<8x32xf32>
    %215 = vector.extract_strided_slice %208 {offsets = [0, 32], sizes = [8, 32], strides = [1, 1]} : vector<8x128xf32> to vector<8x32xf32>
    %216 = arith.negf %215 : vector<8x32xf32>
    %217 = math.exp %216 : vector<8x32xf32>
    %cst_105 = arith.constant 1.000000e+00 : f32
    %218 = vector.broadcast %cst_105 : f32 to vector<8x32xf32>
    %219 = arith.addf %218, %217 : vector<8x32xf32>
    %220 = arith.divf %218, %219 : vector<8x32xf32>
    %221 = vector.extract_strided_slice %208 {offsets = [0, 64], sizes = [8, 32], strides = [1, 1]} : vector<8x128xf32> to vector<8x32xf32>
    %222 = math.tanh %221 : vector<8x32xf32>
    %223 = vector.extract_strided_slice %208 {offsets = [0, 96], sizes = [8, 32], strides = [1, 1]} : vector<8x128xf32> to vector<8x32xf32>
    %224 = arith.negf %223 : vector<8x32xf32>
    %225 = math.exp %224 : vector<8x32xf32>
    %cst_106 = arith.constant 1.000000e+00 : f32
    %226 = vector.broadcast %cst_106 : f32 to vector<8x32xf32>
    %227 = arith.addf %226, %225 : vector<8x32xf32>
    %228 = arith.divf %226, %227 : vector<8x32xf32>
    %c0_107 = arith.constant 0 : index
    %c0_108 = arith.constant 0 : index
    %229 = vector.load %arg10[%c0_107, %c0_108] : memref<8x32xf32, #tpu.memory_space<vmem>>, vector<8x32xf32>
    %230 = arith.mulf %220, %229 : vector<8x32xf32>
    %231 = arith.mulf %214, %222 : vector<8x32xf32>
    %232 = arith.addf %230, %231 : vector<8x32xf32>
    %233 = math.tanh %232 : vector<8x32xf32>
    %234 = arith.mulf %228, %233 : vector<8x32xf32>
    %c0_109 = arith.constant 0 : index
    %c0_110 = arith.constant 0 : index
    %235 = vector.load %arg10[%c0_109, %c0_110] : memref<8x32xf32, #tpu.memory_space<vmem>>, vector<8x32xf32>
    tpu.vector_store %arg10[%c0_109, %c0_110], %232 {strides = array<i32>} : memref<8x32xf32, #tpu.memory_space<vmem>>, vector<8x32xf32>,
    %c0_111 = arith.constant 0 : index
    %c0_112 = arith.constant 0 : index
    %236 = vector.load %arg9[%c0_111, %c0_112] : memref<8x32xf32, #tpu.memory_space<vmem>>, vector<8x32xf32>
    tpu.vector_store %arg9[%c0_111, %c0_112], %234 {strides = array<i32>} : memref<8x32xf32, #tpu.memory_space<vmem>>, vector<8x32xf32>,
    %237 = arith.index_cast %202 : i32 to index
    %c0_113 = arith.constant 0 : index
    %238 = vector.load %arg8[%237, %c0_113] : memref<64x32xf32, #tpu.memory_space<vmem>>, vector<8x32xf32>
    tpu.vector_store %arg8[%237, %c0_113], %234 {strides = array<i32>} : memref<64x32xf32, #tpu.memory_space<vmem>>, vector<8x32xf32>,
    %c6_i32 = arith.constant 6 : i32
    %c8_i32_114 = arith.constant 8 : i32
    %239 = arith.muli %c6_i32, %c8_i32_114 : i32
    %240 = tpu.assume_multiple %239, 8 : i32
    %241 = arith.index_cast %240 : i32 to index
    %c0_115 = arith.constant 0 : index
    %242 = vector.load %arg7[%241, %c0_115] : memref<64x128xf32, #tpu.memory_space<vmem>>, vector<8x128xf32>
    %c0_116 = arith.constant 0 : index
    %c0_117 = arith.constant 0 : index
    %243 = vector.load %arg9[%c0_116, %c0_117] : memref<8x32xf32, #tpu.memory_space<vmem>>, vector<8x32xf32>
    %c0_118 = arith.constant 0 : index
    %c0_119 = arith.constant 0 : index
    %244 = vector.load %arg3[%c0_118, %c0_119] : memref<32x128xf32, #tpu.memory_space<vmem>>, vector<32x128xf32>
    %cst_120 = arith.constant dense<0.000000e+00> : vector<8x128xf32>
    %245 = tpu.matmul %243, %244, %cst_120 {dimension_numbers = #tpu.dot_dimension_numbers<[1], [0], [0], [1], [0, 0, 1, 1], [], []>} : vector<8x32xf32>, vector<32x128xf32>, vector<8x128xf32> -> vector<8x128xf32>
    %246 = arith.addf %242, %245 : vector<8x128xf32>
    %247 = vector.extract_strided_slice %246 {offsets = [0, 0], sizes = [8, 32], strides = [1, 1]} : vector<8x128xf32> to vector<8x32xf32>
    %248 = arith.negf %247 : vector<8x32xf32>
    %249 = math.exp %248 : vector<8x32xf32>
    %cst_121 = arith.constant 1.000000e+00 : f32
    %250 = vector.broadcast %cst_121 : f32 to vector<8x32xf32>
    %251 = arith.addf %250, %249 : vector<8x32xf32>
    %252 = arith.divf %250, %251 : vector<8x32xf32>
    %253 = vector.extract_strided_slice %246 {offsets = [0, 32], sizes = [8, 32], strides = [1, 1]} : vector<8x128xf32> to vector<8x32xf32>
    %254 = arith.negf %253 : vector<8x32xf32>
    %255 = math.exp %254 : vector<8x32xf32>
    %cst_122 = arith.constant 1.000000e+00 : f32
    %256 = vector.broadcast %cst_122 : f32 to vector<8x32xf32>
    %257 = arith.addf %256, %255 : vector<8x32xf32>
    %258 = arith.divf %256, %257 : vector<8x32xf32>
    %259 = vector.extract_strided_slice %246 {offsets = [0, 64], sizes = [8, 32], strides = [1, 1]} : vector<8x128xf32> to vector<8x32xf32>
    %260 = math.tanh %259 : vector<8x32xf32>
    %261 = vector.extract_strided_slice %246 {offsets = [0, 96], sizes = [8, 32], strides = [1, 1]} : vector<8x128xf32> to vector<8x32xf32>
    %262 = arith.negf %261 : vector<8x32xf32>
    %263 = math.exp %262 : vector<8x32xf32>
    %cst_123 = arith.constant 1.000000e+00 : f32
    %264 = vector.broadcast %cst_123 : f32 to vector<8x32xf32>
    %265 = arith.addf %264, %263 : vector<8x32xf32>
    %266 = arith.divf %264, %265 : vector<8x32xf32>
    %c0_124 = arith.constant 0 : index
    %c0_125 = arith.constant 0 : index
    %267 = vector.load %arg10[%c0_124, %c0_125] : memref<8x32xf32, #tpu.memory_space<vmem>>, vector<8x32xf32>
    %268 = arith.mulf %258, %267 : vector<8x32xf32>
    %269 = arith.mulf %252, %260 : vector<8x32xf32>
    %270 = arith.addf %268, %269 : vector<8x32xf32>
    %271 = math.tanh %270 : vector<8x32xf32>
    %272 = arith.mulf %266, %271 : vector<8x32xf32>
    %c0_126 = arith.constant 0 : index
    %c0_127 = arith.constant 0 : index
    %273 = vector.load %arg10[%c0_126, %c0_127] : memref<8x32xf32, #tpu.memory_space<vmem>>, vector<8x32xf32>
    tpu.vector_store %arg10[%c0_126, %c0_127], %270 {strides = array<i32>} : memref<8x32xf32, #tpu.memory_space<vmem>>, vector<8x32xf32>,
    %c0_128 = arith.constant 0 : index
    %c0_129 = arith.constant 0 : index
    %274 = vector.load %arg9[%c0_128, %c0_129] : memref<8x32xf32, #tpu.memory_space<vmem>>, vector<8x32xf32>
    tpu.vector_store %arg9[%c0_128, %c0_129], %272 {strides = array<i32>} : memref<8x32xf32, #tpu.memory_space<vmem>>, vector<8x32xf32>,
    %275 = arith.index_cast %240 : i32 to index
    %c0_130 = arith.constant 0 : index
    %276 = vector.load %arg8[%275, %c0_130] : memref<64x32xf32, #tpu.memory_space<vmem>>, vector<8x32xf32>
    tpu.vector_store %arg8[%275, %c0_130], %272 {strides = array<i32>} : memref<64x32xf32, #tpu.memory_space<vmem>>, vector<8x32xf32>,
    %c7_i32 = arith.constant 7 : i32
    %c8_i32_131 = arith.constant 8 : i32
    %277 = arith.muli %c7_i32, %c8_i32_131 : i32
    %278 = tpu.assume_multiple %277, 8 : i32
    %279 = arith.index_cast %278 : i32 to index
    %c0_132 = arith.constant 0 : index
    %280 = vector.load %arg7[%279, %c0_132] : memref<64x128xf32, #tpu.memory_space<vmem>>, vector<8x128xf32>
    %c0_133 = arith.constant 0 : index
    %c0_134 = arith.constant 0 : index
    %281 = vector.load %arg9[%c0_133, %c0_134] : memref<8x32xf32, #tpu.memory_space<vmem>>, vector<8x32xf32>
    %c0_135 = arith.constant 0 : index
    %c0_136 = arith.constant 0 : index
    %282 = vector.load %arg3[%c0_135, %c0_136] : memref<32x128xf32, #tpu.memory_space<vmem>>, vector<32x128xf32>
    %cst_137 = arith.constant dense<0.000000e+00> : vector<8x128xf32>
    %283 = tpu.matmul %281, %282, %cst_137 {dimension_numbers = #tpu.dot_dimension_numbers<[1], [0], [0], [1], [0, 0, 1, 1], [], []>} : vector<8x32xf32>, vector<32x128xf32>, vector<8x128xf32> -> vector<8x128xf32>
    %284 = arith.addf %280, %283 : vector<8x128xf32>
    %285 = vector.extract_strided_slice %284 {offsets = [0, 0], sizes = [8, 32], strides = [1, 1]} : vector<8x128xf32> to vector<8x32xf32>
    %286 = arith.negf %285 : vector<8x32xf32>
    %287 = math.exp %286 : vector<8x32xf32>
    %cst_138 = arith.constant 1.000000e+00 : f32
    %288 = vector.broadcast %cst_138 : f32 to vector<8x32xf32>
    %289 = arith.addf %288, %287 : vector<8x32xf32>
    %290 = arith.divf %288, %289 : vector<8x32xf32>
    %291 = vector.extract_strided_slice %284 {offsets = [0, 32], sizes = [8, 32], strides = [1, 1]} : vector<8x128xf32> to vector<8x32xf32>
    %292 = arith.negf %291 : vector<8x32xf32>
    %293 = math.exp %292 : vector<8x32xf32>
    %cst_139 = arith.constant 1.000000e+00 : f32
    %294 = vector.broadcast %cst_139 : f32 to vector<8x32xf32>
    %295 = arith.addf %294, %293 : vector<8x32xf32>
    %296 = arith.divf %294, %295 : vector<8x32xf32>
    %297 = vector.extract_strided_slice %284 {offsets = [0, 64], sizes = [8, 32], strides = [1, 1]} : vector<8x128xf32> to vector<8x32xf32>
    %298 = math.tanh %297 : vector<8x32xf32>
    %299 = vector.extract_strided_slice %284 {offsets = [0, 96], sizes = [8, 32], strides = [1, 1]} : vector<8x128xf32> to vector<8x32xf32>
    %300 = arith.negf %299 : vector<8x32xf32>
    %301 = math.exp %300 : vector<8x32xf32>
    %cst_140 = arith.constant 1.000000e+00 : f32
    %302 = vector.broadcast %cst_140 : f32 to vector<8x32xf32>
    %303 = arith.addf %302, %301 : vector<8x32xf32>
    %304 = arith.divf %302, %303 : vector<8x32xf32>
    %c0_141 = arith.constant 0 : index
    %c0_142 = arith.constant 0 : index
    %305 = vector.load %arg10[%c0_141, %c0_142] : memref<8x32xf32, #tpu.memory_space<vmem>>, vector<8x32xf32>
    %306 = arith.mulf %296, %305 : vector<8x32xf32>
    %307 = arith.mulf %290, %298 : vector<8x32xf32>
    %308 = arith.addf %306, %307 : vector<8x32xf32>
    %309 = math.tanh %308 : vector<8x32xf32>
    %310 = arith.mulf %304, %309 : vector<8x32xf32>
    %c0_143 = arith.constant 0 : index
    %c0_144 = arith.constant 0 : index
    %311 = vector.load %arg10[%c0_143, %c0_144] : memref<8x32xf32, #tpu.memory_space<vmem>>, vector<8x32xf32>
    tpu.vector_store %arg10[%c0_143, %c0_144], %308 {strides = array<i32>} : memref<8x32xf32, #tpu.memory_space<vmem>>, vector<8x32xf32>,
    %c0_145 = arith.constant 0 : index
    %c0_146 = arith.constant 0 : index
    %312 = vector.load %arg9[%c0_145, %c0_146] : memref<8x32xf32, #tpu.memory_space<vmem>>, vector<8x32xf32>
    tpu.vector_store %arg9[%c0_145, %c0_146], %310 {strides = array<i32>} : memref<8x32xf32, #tpu.memory_space<vmem>>, vector<8x32xf32>,
    %313 = arith.index_cast %278 : i32 to index
    %c0_147 = arith.constant 0 : index
    %314 = vector.load %arg8[%313, %c0_147] : memref<64x32xf32, #tpu.memory_space<vmem>>, vector<8x32xf32>
    tpu.vector_store %arg8[%313, %c0_147], %310 {strides = array<i32>} : memref<64x32xf32, #tpu.memory_space<vmem>>, vector<8x32xf32>,
    %c8_i32_148 = arith.constant 8 : i32
    %c0_149 = arith.constant 0 : index
    %c0_150 = arith.constant 0 : index
    %315 = vector.load %arg8[%c0_149, %c0_150] : memref<64x32xf32, #tpu.memory_space<vmem>>, vector<64x32xf32>
    %c0_151 = arith.constant 0 : index
    %c0_152 = arith.constant 0 : index
    %316 = vector.load %arg5[%c0_151, %c0_152] : memref<32x128xf32, #tpu.memory_space<vmem>>, vector<32x128xf32>
    %cst_153 = arith.constant dense<0.000000e+00> : vector<64x128xf32>
    %317 = tpu.matmul %315, %316, %cst_153 {dimension_numbers = #tpu.dot_dimension_numbers<[1], [0], [0], [1], [0, 0, 1, 1], [], []>} : vector<64x32xf32>, vector<32x128xf32>, vector<64x128xf32> -> vector<64x128xf32>
    %c0_154 = arith.constant 0 : index
    %c0_155 = arith.constant 0 : index
    %318 = vector.load %arg6[%c0_154, %c0_155] : memref<64x128xf32, #tpu.memory_space<vmem>>, vector<64x128xf32>
    tpu.vector_store %arg6[%c0_154, %c0_155], %317 {strides = array<i32>} : memref<64x128xf32, #tpu.memory_space<vmem>>, vector<64x128xf32>,
    return
  }
  func.func @transform_0(%arg0: i32) -> (i32, i32) {
    %c0_i32 = arith.constant 0 : i32
    %c0_i32_0 = arith.constant 0 : i32
    %c0_i32_1 = arith.constant 0 : i32
    return %c0_i32, %c0_i32_0 : i32, i32
  }
  func.func @transform_1(%arg0: i32) -> (i32, i32) {
    %c0_i32 = arith.constant 0 : i32
    %c0_i32_0 = arith.constant 0 : i32
    %c0_i32_1 = arith.constant 0 : i32
    return %c0_i32, %c0_i32_0 : i32, i32
  }
  func.func @transform_2(%arg0: i32) -> (i32, i32) {
    %c0_i32 = arith.constant 0 : i32
    %c0_i32_0 = arith.constant 0 : i32
    %c0_i32_1 = arith.constant 0 : i32
    return %c0_i32, %c0_i32_0 : i32, i32
  }
  func.func @transform_3(%arg0: i32) -> (i32, i32) {
    %c0_i32 = arith.constant 0 : i32
    %c0_i32_0 = arith.constant 0 : i32
    %c0_i32_1 = arith.constant 0 : i32
    return %c0_i32, %c0_i32_0 : i32, i32
  }
  func.func @transform_4(%arg0: i32) -> (i32, i32) {
    %c0_i32 = arith.constant 0 : i32
    %c0_i32_0 = arith.constant 0 : i32
    %c0_i32_1 = arith.constant 0 : i32
    return %c0_i32, %c0_i32_0 : i32, i32
  }
  func.func @transform_5(%arg0: i32) -> (i32, i32) {
    %c0_i32 = arith.constant 0 : i32
    %c0_i32_0 = arith.constant 0 : i32
    %c0_i32_1 = arith.constant 0 : i32
    return %c0_i32, %c0_i32_0 : i32, i32
  }
}

</mosaic_0001>

<llo_original>
// kernel: tpu_custom_call.1
$region0: #{tpu_custom_call.1}
  #allocation0 [shape = 'u32[]', space=smem, size = 0x4, offset = 0x4, fixed_abs, tag = 'smem constant byte address 0x4 - core index']
  #allocation1 [shape = 'u32[144,128]{1,0:T(1,128)}', space=vmem, size = 0x12000, scoped, tag = 'internal scratch']
  #allocation2 [shape = 'f32[64,128]{1,0:T(8,128)}', space=vmem, size = 0x8000, scoped, tag = 'scratch operand']
  #allocation3 [shape = 'f32[64,32]{1,0:T(8,128)}', space=vmem, size = 0x8000, scoped, tag = 'scratch operand']
  #allocation4 [shape = 'f32[8,32]{1,0:T(8,128)}', space=vmem, size = 0x1000, scoped, tag = 'scratch operand']
  #allocation5 [shape = 'f32[8,32]{1,0:T(8,128)}', space=vmem, size = 0x1000, scoped, tag = 'scratch operand']
  %s0 = inlined_call_operand.vmem [shape: f32[64,16], index: 0, kind: input, shape index: {}]
  %s1 = inlined_call_operand.vmem [shape: f32[16,128], index: 1, kind: input, shape index: {}]
  %s2 = inlined_call_operand.vmem [shape: f32[32,128], index: 2, kind: input, shape index: {}]
  %s3 = inlined_call_operand.vmem [shape: f32[1,128], index: 3, kind: input, shape index: {}]
  %s4 = inlined_call_operand.vmem [shape: f32[32,128], index: 4, kind: input, shape index: {}]
  %s5 = inlined_call_operand.hbm [shape: f32[64,128], index: 5, kind: output, shape index: {}]
  %s6 = sld [smem:[#allocation0]]
  $region30: #{tpu_custom_call.1} parent=0
    _
  %s8 = ssub.s32 1, %s6
  %s9 = scalar_select 0, %s8, %s6
  $region1: #{tpu_custom_call.1} parent=0
    #allocation6 [shape = 'u8[32768]{0}', space=vmem, size = 0x8000, scoped, tag = 'output window, operand 0, single buffered']
    #allocation7 [shape = 's32[1]{0}', space=sflag, size = 0x4, scoped, tag = 'scoped memory for tpu_custom_call.1']
    %10 = vsyncpa [#allocation7], 0
    // Predicated region
    $region2: #{tpu_custom_call.1} parent=1 // pred_check
      _
    $region3: #{tpu_custom_call.1} parent=1 // pred_check_branch
      %12 = sbr.rel (0) target = $region5
    $region4: #{tpu_custom_call.1} parent=1 // pred_region
      _
    $region5: #{tpu_custom_call.1} parent=1 // pred_fallthru
      _
    // Predicated region
    $region6: #{tpu_custom_call.1} parent=1 // pred_check
      _
    $region7: #{tpu_custom_call.1} parent=1 // pred_check_branch
      %14 = sbr.rel (0) target = $region9
    $region8: #{tpu_custom_call.1} parent=1 // pred_region
      _
    $region9: #{tpu_custom_call.1} parent=1 // pred_fallthru
      _
    // Predicated region
    $region10: #{tpu_custom_call.1} parent=1 // pred_check
      _
    $region11: #{tpu_custom_call.1} parent=1 // pred_check_branch
      %16 = sbr.rel (0) target = $region13
    $region12: #{tpu_custom_call.1} parent=1 // pred_region
      _
    $region13: #{tpu_custom_call.1} parent=1 // pred_fallthru
      _
    // Predicated region
    $region14: #{tpu_custom_call.1} parent=1 // pred_check
      _
    $region15: #{tpu_custom_call.1} parent=1 // pred_check_branch
      %18 = sbr.rel (0) target = $region17
    $region16: #{tpu_custom_call.1} parent=1 // pred_region
      _
    $region17: #{tpu_custom_call.1} parent=1 // pred_fallthru
      _
    // Predicated region
    $region18: #{tpu_custom_call.1} parent=1 // pred_check
      _
    $region19: #{tpu_custom_call.1} parent=1 // pred_check_branch
      %20 = sbr.rel (0) target = $region21
    $region20: #{tpu_custom_call.1} parent=1 // pred_region
      _
    $region21: #{tpu_custom_call.1} parent=1 // pred_fallthru
      _
    %v21 = vld [vmem:[%s0] sm:$0xff]
    %v22 = vld [vmem:[%s0 + $0x8] sm:$0xff]
    %v23 = vld [vmem:[%s0 + $0x10] sm:$0xff]
    %v24 = vld [vmem:[%s0 + $0x18] sm:$0xff]
    %v25 = vld [vmem:[%s0 + $0x20] sm:$0xff]
    %v26 = vld [vmem:[%s0 + $0x28] sm:$0xff]
    %v27 = vld [vmem:[%s0 + $0x30] sm:$0xff]
    %v28 = vld [vmem:[%s0 + $0x38] sm:$0xff]
    %v29 = vld [vmem:[%s1] sm:$0xff]
    %v30 = vld [vmem:[%s1 + $0x8] sm:$0xff]
    %v31 = vld [vmem:[%s3] sm:$0x1]
    %v33 = vlaneseq
    %v34 = vshrl.u32 %v33, 7
    %v35 = vsub.s32 0, %v34
    %v36 = vrot.slane %v31, %v35
    %vm38 = vcmask 130048
    %v40 = vsel %vm38, %v21, 0
    %v43 = vsel %vm38, %v22, 0
    %v46 = vsel %vm38, %v23, 0
    %v49 = vsel %vm38, %v24, 0
    %v52 = vsel %vm38, %v25, 0
    %v55 = vsel %vm38, %v26, 0
    %v58 = vsel %vm38, %v27, 0
    %v61 = vsel %vm38, %v28, 0
    %63 = vmatprep.subr.mxu0 0.0
    %64 = vmatpush1.msra.mxu0 0.0
    %65 = vmatprep.subr.mxu0 0.0
    %66 = vmatpush1.msra.mxu0 0.0
    %67 = vmatprep.subr.mxu0 0.0
    %68 = vmatpush1.msra.mxu0 0.0
    %69 = vmatprep.subr.mxu0 0.0
    %70 = vmatpush1.msra.mxu0 0.0
    %71 = vmatprep.subr.mxu0 0.0
    %72 = vmatpush1.msra.mxu0 0.0
    %73 = vmatprep.subr.mxu0 0.0
    %74 = vmatpush1.msra.mxu0 0.0
    %75 = vmatprep.subr.mxu0 0.0
    %76 = vmatpush1.msra.mxu0 0.0
    %77 = vmatprep.subr.mxu0 0.0
    %78 = vmatpush1.msra.mxu0 0.0
    %79 = vmatprep.subr.mxu0 0.0
    %80 = vmatpush1.msra.mxu0 0.0
    %81 = vmatprep.subr.mxu0 0.0
    %82 = vmatpush1.msra.mxu0 0.0
    %83 = vmatprep.subr.mxu0 0.0
    %84 = vmatpush1.msra.mxu0 0.0
    %85 = vmatprep.subr.mxu0 0.0
    %86 = vmatpush1.msra.mxu0 0.0
    %87 = vmatprep.subr.mxu0 0.0
    %88 = vmatpush1.msra.mxu0 0.0
    %89 = vmatprep.subr.mxu0 0.0
    %90 = vmatpush1.msra.mxu0 0.0
    %91 = vmatprep.subr.mxu0 0.0
    %92 = vmatpush1.msra.mxu0 %v30
    %93 = vmatprep.subr.mxu0 0.0
    %94 = vmatpush1.msra.mxu0 %v29
    %95 = vmatprep.subr.mxu0 0.0
    %96 = vmatpush2.msra.mxu0 0.0
    %97 = vmatprep.subr.mxu0 0.0
    %98 = vmatpush2.msra.mxu0 0.0
    %99 = vmatprep.subr.mxu0 0.0
    %100 = vmatpush2.msra.mxu0 0.0
    %101 = vmatprep.subr.mxu0 0.0
    %102 = vmatpush2.msra.mxu0 0.0
    %103 = vmatprep.subr.mxu0 0.0
    %104 = vmatpush2.msra.mxu0 0.0
    %105 = vmatprep.subr.mxu0 0.0
    %106 = vmatpush2.msra.mxu0 0.0
    %107 = vmatprep.subr.mxu0 0.0
    %108 = vmatpush2.msra.mxu0 0.0
    %109 = vmatprep.subr.mxu0 0.0
    %110 = vmatpush2.msra.mxu0 0.0
    %111 = vmatprep.subr.mxu0 0.0
    %112 = vmatpush2.msra.mxu0 0.0
    %113 = vmatprep.subr.mxu0 0.0
    %114 = vmatpush2.msra.mxu0 0.0
    %115 = vmatprep.subr.mxu0 0.0
    %116 = vmatpush2.msra.mxu0 0.0
    %117 = vmatprep.subr.mxu0 0.0
    %118 = vmatpush2.msra.mxu0 0.0
    %119 = vmatprep.subr.mxu0 0.0
    %120 = vmatpush2.msra.mxu0 0.0
    %121 = vmatprep.subr.mxu0 0.0
    %122 = vmatpush2.msra.mxu0 0.0
    %123 = vmatprep.subr.mxu0 0.0
    %124 = vmatpush2.msra.mxu0 0.0
    %125 = vmatprep.subr.mxu0 0.0
    %126 = vmatpush2.msra.mxu0 0.0
    %127 = vmatprep.mubr.f32.mxu0 0.0
    %128 = vmatmul.mubr.f32.gmra.mxu0 %v40
    %v129 = vpop.f32.mrf.mxu0
    %v130 = vadd.f32 %v36, %v129
    %v131 = vpop.f32.mrf.mxu0
    %132 = vmatprep.mubr.f32.mxu0 0.0
    %133 = vmatmul.mubr.f32.gmra.mxu0 %v43
    %v134 = vpop.f32.mrf.mxu0
    %v135 = vadd.f32 %v36, %v134
    %v136 = vpop.f32.mrf.mxu0
    %137 = vmatprep.mubr.f32.mxu0 0.0
    %138 = vmatmul.mubr.f32.gmra.mxu0 %v46
    %v139 = vpop.f32.mrf.mxu0
    %v140 = vadd.f32 %v36, %v139
    %v141 = vpop.f32.mrf.mxu0
    %142 = vmatprep.mubr.f32.mxu0 0.0
    %143 = vmatmul.mubr.f32.gmra.mxu0 %v49
    %v144 = vpop.f32.mrf.mxu0
    %v145 = vadd.f32 %v36, %v144
    %v146 = vpop.f32.mrf.mxu0
    %147 = vmatprep.mubr.f32.mxu0 0.0
    %148 = vmatmul.mubr.f32.gmra.mxu0 %v52
    %v149 = vpop.f32.mrf.mxu0
    %v150 = vadd.f32 %v36, %v149
    %v151 = vpop.f32.mrf.mxu0
    %152 = vmatprep.mubr.f32.mxu0 0.0
    %153 = vmatmul.mubr.f32.gmra.mxu0 %v55
    %v154 = vpop.f32.mrf.mxu0
    %v155 = vadd.f32 %v36, %v154
    %v156 = vpop.f32.mrf.mxu0
    %157 = vmatprep.mubr.f32.mxu0 0.0
    %158 = vmatmul.mubr.f32.gmra.mxu0 %v58
    %v159 = vpop.f32.mrf.mxu0
    %v160 = vadd.f32 %v36, %v159
    %v161 = vpop.f32.mrf.mxu0
    %162 = vmatprep.mubr.f32.mxu0 0.0
    %163 = vmatmul.mubr.f32.gmra.mxu0 %v61
    %v164 = vpop.f32.mrf.mxu0
    %v165 = vadd.f32 %v36, %v164
    %v166 = vpop.f32.mrf.mxu0
    %167 = vdwg.mxu0
    %168 = vst [vmem:[#allocation2] sm:$0xff] %v130
    %169 = vst [vmem:[#allocation2 + $0x8] sm:$0xff] %v135
    %170 = vst [vmem:[#allocation2 + $0x10] sm:$0xff] %v140
    %171 = vst [vmem:[#allocation2 + $0x18] sm:$0xff] %v145
    %172 = vst [vmem:[#allocation2 + $0x20] sm:$0xff] %v150
    %173 = vst [vmem:[#allocation2 + $0x28] sm:$0xff] %v155
    %174 = vst [vmem:[#allocation2 + $0x30] sm:$0xff] %v160
    %175 = vst [vmem:[#allocation2 + $0x38] sm:$0xff] %v165
    %vm176 = vcmask 261120
    %177 = vst.msk [vmem:[#allocation4] sm:$0xff] %vm176, 0.0
    %178 = vst.msk [vmem:[#allocation5] sm:$0xff] %vm176, 0.0
    %v179 = vld [vmem:[#allocation2] sm:$0xff]
    %v180 = vld [vmem:[#allocation4] sm:$0xff]
    %v181 = vld [vmem:[%s2] sm:$0xff]
    %v182 = vld [vmem:[%s2 + $0x8] sm:$0xff]
    %v183 = vld [vmem:[%s2 + $0x10] sm:$0xff]
    %v184 = vld [vmem:[%s2 + $0x18] sm:$0xff]
    %v186 = vsel %vm176, %v180, 0
    %188 = vmatprep.subr.mxu0 0.0
    %189 = vmatpush1.msra.mxu0 0.0
    %190 = vmatprep.subr.mxu0 0.0
    %191 = vmatpush1.msra.mxu0 0.0
    %192 = vmatprep.subr.mxu0 0.0
    %193 = vmatpush1.msra.mxu0 0.0
    %194 = vmatprep.subr.mxu0 0.0
    %195 = vmatpush1.msra.mxu0 0.0
    %196 = vmatprep.subr.mxu0 0.0
    %197 = vmatpush1.msra.mxu0 0.0
    %198 = vmatprep.subr.mxu0 0.0
    %199 = vmatpush1.msra.mxu0 0.0
    %200 = vmatprep.subr.mxu0 0.0
    %201 = vmatpush1.msra.mxu0 0.0
    %202 = vmatprep.subr.mxu0 0.0
    %203 = vmatpush1.msra.mxu0 0.0
    %204 = vmatprep.subr.mxu0 0.0
    %205 = vmatpush1.msra.mxu0 0.0
    %206 = vmatprep.subr.mxu0 0.0
    %207 = vmatpush1.msra.mxu0 0.0
    %208 = vmatprep.subr.mxu0 0.0
    %209 = vmatpush1.msra.mxu0 0.0
    %210 = vmatprep.subr.mxu0 0.0
    %211 = vmatpush1.msra.mxu0 0.0
    %212 = vmatprep.subr.mxu0 0.0
    %213 = vmatpush1.msra.mxu0 %v184
    %214 = vmatprep.subr.mxu0 0.0
    %215 = vmatpush1.msra.mxu0 %v183
    %216 = vmatprep.subr.mxu0 0.0
    %217 = vmatpush1.msra.mxu0 %v182
    %218 = vmatprep.subr.mxu0 0.0
    %219 = vmatpush1.msra.mxu0 %v181
    %220 = vmatprep.subr.mxu0 0.0
    %221 = vmatpush2.msra.mxu0 0.0
    %222 = vmatprep.subr.mxu0 0.0
    %223 = vmatpush2.msra.mxu0 0.0
    %224 = vmatprep.subr.mxu0 0.0
    %225 = vmatpush2.msra.mxu0 0.0
    %226 = vmatprep.subr.mxu0 0.0
    %227 = vmatpush2.msra.mxu0 0.0
    %228 = vmatprep.subr.mxu0 0.0
    %229 = vmatpush2.msra.mxu0 0.0
    %230 = vmatprep.subr.mxu0 0.0
    %231 = vmatpush2.msra.mxu0 0.0
    %232 = vmatprep.subr.mxu0 0.0
    %233 = vmatpush2.msra.mxu0 0.0
    %234 = vmatprep.subr.mxu0 0.0
    %235 = vmatpush2.msra.mxu0 0.0
    %236 = vmatprep.subr.mxu0 0.0
    %237 = vmatpush2.msra.mxu0 0.0
    %238 = vmatprep.subr.mxu0 0.0
    %239 = vmatpush2.msra.mxu0 0.0
    %240 = vmatprep.subr.mxu0 0.0
    %241 = vmatpush2.msra.mxu0 0.0
    %242 = vmatprep.subr.mxu0 0.0
    %243 = vmatpush2.msra.mxu0 0.0
    %244 = vmatprep.subr.mxu0 0.0
    %245 = vmatpush2.msra.mxu0 0.0
    %246 = vmatprep.subr.mxu0 0.0
    %247 = vmatpush2.msra.mxu0 0.0
    %248 = vmatprep.subr.mxu0 0.0
    %249 = vmatpush2.msra.mxu0 0.0
    %250 = vmatprep.subr.mxu0 0.0
    %251 = vmatpush2.msra.mxu0 0.0
    %252 = vmatprep.mubr.f32.mxu0 0.0
    %253 = vmatmul.mubr.f32.gmra.mxu0 %v186
    %v254 = vpop.f32.mrf.mxu0
    %v255 = vadd.f32 0.0, %v254
    %v256 = vpop.f32.mrf.mxu0
    %257 = vdwg.mxu0
    %v258 = vadd.f32 %v179, %v255
    %v259 = vxor.u32 %v258, 2147483648
    %v260 = vmul.f32 %v259, 1.442695
    %v261 = vpow.pop %v260
    %v262 = vadd.f32 %v261, 1.0
    %v263 = vrcp.pop %v262
    %v264 = vmul.f32 1.0, %v263
    %v265 = vtanh.pop %v258
    %v266 = vld [vmem:[#allocation5] sm:$0xff]
    %268 = vrot.lane.b32.xlu0 %v266, 32
    %v269 = vpop.permute.xlu0 %268
    %v271 = vmul.f32 %v264, %v269
    %273 = vrot.lane.b32.xlu0 %v265, 64
    %v274 = vpop.permute.xlu0 %273
    %v276 = vmul.f32 %v264, %v274
    %278 = vrot.lane.b32.xlu0 %v276, 32
    %v279 = vpop.permute.xlu0 %278
    %v281 = vadd.f32 %v271, %v279
    %v282 = vtanh.pop %v281
    %284 = vrot.lane.b32.xlu0 %v282, 64
    %v285 = vpop.permute.xlu0 %284
    %v287 = vmul.f32 %v264, %v285
    %289 = vrot.lane.b32.xlu0 %v281, 96
    %v290 = vpop.permute.xlu0 %289
    %292 = vst.msk [vmem:[#allocation5] sm:$0xff] %vm176, %v290
    %294 = vrot.lane.b32.xlu0 %v287, 32
    %v295 = vpop.permute.xlu0 %294
    %297 = vst.msk [vmem:[#allocation4] sm:$0xff] %vm176, %v295
    %298 = vst.msk [vmem:[#allocation3] sm:$0xff] %vm176, %v295
    %s299 = scalar_lea.vmem [#allocation2], 8
    %v300 = vld [vmem:[%s299] sm:$0xff]
    %v301 = vld [vmem:[#allocation4] sm:$0xff]
    %v302 = vld [vmem:[%s2] sm:$0xff]
    %v303 = vld [vmem:[%s2 + $0x8] sm:$0xff]
    %v304 = vld [vmem:[%s2 + $0x10] sm:$0xff]
    %v305 = vld [vmem:[%s2 + $0x18] sm:$0xff]
    %v307 = vsel %vm176, %v301, 0
    %309 = vmatprep.subr.mxu0 0.0
    %310 = vmatpush1.msra.mxu0 0.0
    %311 = vmatprep.subr.mxu0 0.0
    %312 = vmatpush1.msra.mxu0 0.0
    %313 = vmatprep.subr.mxu0 0.0
    %314 = vmatpush1.msra.mxu0 0.0
    %315 = vmatprep.subr.mxu0 0.0
    %316 = vmatpush1.msra.mxu0 0.0
    %317 = vmatprep.subr.mxu0 0.0
    %318 = vmatpush1.msra.mxu0 0.0
    %319 = vmatprep.subr.mxu0 0.0
    %320 = vmatpush1.msra.mxu0 0.0
    %321 = vmatprep.subr.mxu0 0.0
    %322 = vmatpush1.msra.mxu0 0.0
    %323 = vmatprep.subr.mxu0 0.0
    %324 = vmatpush1.msra.mxu0 0.0
    %325 = vmatprep.subr.mxu0 0.0
    %326 = vmatpush1.msra.mxu0 0.0
    %327 = vmatprep.subr.mxu0 0.0
    %328 = vmatpush1.msra.mxu0 0.0
    %329 = vmatprep.subr.mxu0 0.0
    %330 = vmatpush1.msra.mxu0 0.0
    %331 = vmatprep.subr.mxu0 0.0
    %332 = vmatpush1.msra.mxu0 0.0
    %333 = vmatprep.subr.mxu0 0.0
    %334 = vmatpush1.msra.mxu0 %v305
    %335 = vmatprep.subr.mxu0 0.0
    %336 = vmatpush1.msra.mxu0 %v304
    %337 = vmatprep.subr.mxu0 0.0
    %338 = vmatpush1.msra.mxu0 %v303
    %339 = vmatprep.subr.mxu0 0.0
    %340 = vmatpush1.msra.mxu0 %v302
    %341 = vmatprep.subr.mxu0 0.0
    %342 = vmatpush2.msra.mxu0 0.0
    %343 = vmatprep.subr.mxu0 0.0
    %344 = vmatpush2.msra.mxu0 0.0
    %345 = vmatprep.subr.mxu0 0.0
    %346 = vmatpush2.msra.mxu0 0.0
    %347 = vmatprep.subr.mxu0 0.0
    %348 = vmatpush2.msra.mxu0 0.0
    %349 = vmatprep.subr.mxu0 0.0
    %350 = vmatpush2.msra.mxu0 0.0
    %351 = vmatprep.subr.mxu0 0.0
    %352 = vmatpush2.msra.mxu0 0.0
    %353 = vmatprep.subr.mxu0 0.0
    %354 = vmatpush2.msra.mxu0 0.0
    %355 = vmatprep.subr.mxu0 0.0
    %356 = vmatpush2.msra.mxu0 0.0
    %357 = vmatprep.subr.mxu0 0.0
    %358 = vmatpush2.msra.mxu0 0.0
    %359 = vmatprep.subr.mxu0 0.0
    %360 = vmatpush2.msra.mxu0 0.0
    %361 = vmatprep.subr.mxu0 0.0
    %362 = vmatpush2.msra.mxu0 0.0
    %363 = vmatprep.subr.mxu0 0.0
    %364 = vmatpush2.msra.mxu0 0.0
    %365 = vmatprep.subr.mxu0 0.0
    %366 = vmatpush2.msra.mxu0 0.0
    %367 = vmatprep.subr.mxu0 0.0
    %368 = vmatpush2.msra.mxu0 0.0
    %369 = vmatprep.subr.mxu0 0.0
    %370 = vmatpush2.msra.mxu0 0.0
    %371 = vmatprep.subr.mxu0 0.0
    %372 = vmatpush2.msra.mxu0 0.0
    %373 = vmatprep.mubr.f32.mxu0 0.0
    %374 = vmatmul.mubr.f32.gmra.mxu0 %v307
    %v375 = vpop.f32.mrf.mxu0
    %v376 = vadd.f32 0.0, %v375
    %v377 = vpop.f32.mrf.mxu0
    %378 = vdwg.mxu0
    %v379 = vadd.f32 %v300, %v376
    %v380 = vxor.u32 %v379, 2147483648
    %v381 = vmul.f32 %v380, 1.442695
    %v382 = vpow.pop %v381
    %v383 = vadd.f32 %v382, 1.0
    %v384 = vrcp.pop %v383
    %v385 = vmul.f32 1.0, %v384
    %v386 = vtanh.pop %v379
    %v387 = vld [vmem:[#allocation5] sm:$0xff]
    %389 = vrot.lane.b32.xlu0 %v387, 32
    %v390 = vpop.permute.xlu0 %389
    %v392 = vmul.f32 %v385, %v390
    %394 = vrot.lane.b32.xlu0 %v386, 64
    %v395 = vpop.permute.xlu0 %394
    %v397 = vmul.f32 %v385, %v395
    %399 = vrot.lane.b32.xlu0 %v397, 32
    %v400 = vpop.permute.xlu0 %399
    %v402 = vadd.f32 %v392, %v400
    %v403 = vtanh.pop %v402
    %405 = vrot.lane.b32.xlu0 %v403, 64
    %v406 = vpop.permute.xlu0 %405
    %v408 = vmul.f32 %v385, %v406
    %410 = vrot.lane.b32.xlu0 %v402, 96
    %v411 = vpop.permute.xlu0 %410
    %413 = vst.msk [vmem:[#allocation5] sm:$0xff] %vm176, %v411
    %415 = vrot.lane.b32.xlu0 %v408, 32
    %v416 = vpop.permute.xlu0 %415
    %418 = vst.msk [vmem:[#allocation4] sm:$0xff] %vm176, %v416
    %s419 = scalar_lea.vmem [#allocation3], 8
    %420 = vst.msk [vmem:[%s419] sm:$0xff] %vm176, %v416
    %s421 = scalar_lea.vmem [#allocation2], 16
    %v422 = vld [vmem:[%s421] sm:$0xff]
    %v423 = vld [vmem:[#allocation4] sm:$0xff]
    %v424 = vld [vmem:[%s2] sm:$0xff]
    %v425 = vld [vmem:[%s2 + $0x8] sm:$0xff]
    %v426 = vld [vmem:[%s2 + $0x10] sm:$0xff]
    %v427 = vld [vmem:[%s2 + $0x18] sm:$0xff]
    %v429 = vsel %vm176, %v423, 0
    %431 = vmatprep.subr.mxu0 0.0
    %432 = vmatpush1.msra.mxu0 0.0
    %433 = vmatprep.subr.mxu0 0.0
    %434 = vmatpush1.msra.mxu0 0.0
    %435 = vmatprep.subr.mxu0 0.0
    %436 = vmatpush1.msra.mxu0 0.0
    %437 = vmatprep.subr.mxu0 0.0
    %438 = vmatpush1.msra.mxu0 0.0
    %439 = vmatprep.subr.mxu0 0.0
    %440 = vmatpush1.msra.mxu0 0.0
    %441 = vmatprep.subr.mxu0 0.0
    %442 = vmatpush1.msra.mxu0 0.0
    %443 = vmatprep.subr.mxu0 0.0
    %444 = vmatpush1.msra.mxu0 0.0
    %445 = vmatprep.subr.mxu0 0.0
    %446 = vmatpush1.msra.mxu0 0.0
    %447 = vmatprep.subr.mxu0 0.0
    %448 = vmatpush1.msra.mxu0 0.0
    %449 = vmatprep.subr.mxu0 0.0
    %450 = vmatpush1.msra.mxu0 0.0
    %451 = vmatprep.subr.mxu0 0.0
    %452 = vmatpush1.msra.mxu0 0.0
    %453 = vmatprep.subr.mxu0 0.0
    %454 = vmatpush1.msra.mxu0 0.0
    %455 = vmatprep.subr.mxu0 0.0
    %456 = vmatpush1.msra.mxu0 %v427
    %457 = vmatprep.subr.mxu0 0.0
    %458 = vmatpush1.msra.mxu0 %v426
    %459 = vmatprep.subr.mxu0 0.0
    %460 = vmatpush1.msra.mxu0 %v425
    %461 = vmatprep.subr.mxu0 0.0
    %462 = vmatpush1.msra.mxu0 %v424
    %463 = vmatprep.subr.mxu0 0.0
    %464 = vmatpush2.msra.mxu0 0.0
    %465 = vmatprep.subr.mxu0 0.0
    %466 = vmatpush2.msra.mxu0 0.0
    %467 = vmatprep.subr.mxu0 0.0
    %468 = vmatpush2.msra.mxu0 0.0
    %469 = vmatprep.subr.mxu0 0.0
    %470 = vmatpush2.msra.mxu0 0.0
    %471 = vmatprep.subr.mxu0 0.0
    %472 = vmatpush2.msra.mxu0 0.0
    %473 = vmatprep.subr.mxu0 0.0
    %474 = vmatpush2.msra.mxu0 0.0
    %475 = vmatprep.subr.mxu0 0.0
    %476 = vmatpush2.msra.mxu0 0.0
    %477 = vmatprep.subr.mxu0 0.0
    %478 = vmatpush2.msra.mxu0 0.0
    %479 = vmatprep.subr.mxu0 0.0
    %480 = vmatpush2.msra.mxu0 0.0
    %481 = vmatprep.subr.mxu0 0.0
    %482 = vmatpush2.msra.mxu0 0.0
    %483 = vmatprep.subr.mxu0 0.0
    %484 = vmatpush2.msra.mxu0 0.0
    %485 = vmatprep.subr.mxu0 0.0
    %486 = vmatpush2.msra.mxu0 0.0
    %487 = vmatprep.subr.mxu0 0.0
    %488 = vmatpush2.msra.mxu0 0.0
    %489 = vmatprep.subr.mxu0 0.0
    %490 = vmatpush2.msra.mxu0 0.0
    %491 = vmatprep.subr.mxu0 0.0
    %492 = vmatpush2.msra.mxu0 0.0
    %493 = vmatprep.subr.mxu0 0.0
    %494 = vmatpush2.msra.mxu0 0.0
    %495 = vmatprep.mubr.f32.mxu0 0.0
    %496 = vmatmul.mubr.f32.gmra.mxu0 %v429
    %v497 = vpop.f32.mrf.mxu0
    %v498 = vadd.f32 0.0, %v497
    %v499 = vpop.f32.mrf.mxu0
    %500 = vdwg.mxu0
    %v501 = vadd.f32 %v422, %v498
    %v502 = vxor.u32 %v501, 2147483648
    %v503 = vmul.f32 %v502, 1.442695
    %v504 = vpow.pop %v503
    %v505 = vadd.f32 %v504, 1.0
    %v506 = vrcp.pop %v505
    %v507 = vmul.f32 1.0, %v506
    %v508 = vtanh.pop %v501
    %v509 = vld [vmem:[#allocation5] sm:$0xff]
    %511 = vrot.lane.b32.xlu0 %v509, 32
    %v512 = vpop.permute.xlu0 %511
    %v514 = vmul.f32 %v507, %v512
    %516 = vrot.lane.b32.xlu0 %v508, 64
    %v517 = vpop.permute.xlu0 %516
    %v519 = vmul.f32 %v507, %v517
    %521 = vrot.lane.b32.xlu0 %v519, 32
    %v522 = vpop.permute.xlu0 %521
    %v524 = vadd.f32 %v514, %v522
    %v525 = vtanh.pop %v524
    %527 = vrot.lane.b32.xlu0 %v525, 64
    %v528 = vpop.permute.xlu0 %527
    %v530 = vmul.f32 %v507, %v528
    %532 = vrot.lane.b32.xlu0 %v524, 96
    %v533 = vpop.permute.xlu0 %532
    %535 = vst.msk [vmem:[#allocation5] sm:$0xff] %vm176, %v533
    %537 = vrot.lane.b32.xlu0 %v530, 32
    %v538 = vpop.permute.xlu0 %537
    %540 = vst.msk [vmem:[#allocation4] sm:$0xff] %vm176, %v538
    %s541 = scalar_lea.vmem [#allocation3], 16
    %542 = vst.msk [vmem:[%s541] sm:$0xff] %vm176, %v538
    %s543 = scalar_lea.vmem [#allocation2], 24
    %v544 = vld [vmem:[%s543] sm:$0xff]
    %v545 = vld [vmem:[#allocation4] sm:$0xff]
    %v546 = vld [vmem:[%s2] sm:$0xff]
    %v547 = vld [vmem:[%s2 + $0x8] sm:$0xff]
    %v548 = vld [vmem:[%s2 + $0x10] sm:$0xff]
    %v549 = vld [vmem:[%s2 + $0x18] sm:$0xff]
    %v551 = vsel %vm176, %v545, 0
    %553 = vmatprep.subr.mxu0 0.0
    %554 = vmatpush1.msra.mxu0 0.0
    %555 = vmatprep.subr.mxu0 0.0
    %556 = vmatpush1.msra.mxu0 0.0
    %557 = vmatprep.subr.mxu0 0.0
    %558 = vmatpush1.msra.mxu0 0.0
    %559 = vmatprep.subr.mxu0 0.0
    %560 = vmatpush1.msra.mxu0 0.0
    %561 = vmatprep.subr.mxu0 0.0
    %562 = vmatpush1.msra.mxu0 0.0
    %563 = vmatprep.subr.mxu0 0.0
    %564 = vmatpush1.msra.mxu0 0.0
    %565 = vmatprep.subr.mxu0 0.0
    %566 = vmatpush1.msra.mxu0 0.0
    %567 = vmatprep.subr.mxu0 0.0
    %568 = vmatpush1.msra.mxu0 0.0
    %569 = vmatprep.subr.mxu0 0.0
    %570 = vmatpush1.msra.mxu0 0.0
    %571 = vmatprep.subr.mxu0 0.0
    %572 = vmatpush1.msra.mxu0 0.0
    %573 = vmatprep.subr.mxu0 0.0
    %574 = vmatpush1.msra.mxu0 0.0
    %575 = vmatprep.subr.mxu0 0.0
    %576 = vmatpush1.msra.mxu0 0.0
    %577 = vmatprep.subr.mxu0 0.0
    %578 = vmatpush1.msra.mxu0 %v549
    %579 = vmatprep.subr.mxu0 0.0
    %580 = vmatpush1.msra.mxu0 %v548
    %581 = vmatprep.subr.mxu0 0.0
    %582 = vmatpush1.msra.mxu0 %v547
    %583 = vmatprep.subr.mxu0 0.0
    %584 = vmatpush1.msra.mxu0 %v546
    %585 = vmatprep.subr.mxu0 0.0
    %586 = vmatpush2.msra.mxu0 0.0
    %587 = vmatprep.subr.mxu0 0.0
    %588 = vmatpush2.msra.mxu0 0.0
    %589 = vmatprep.subr.mxu0 0.0
    %590 = vmatpush2.msra.mxu0 0.0
    %591 = vmatprep.subr.mxu0 0.0
    %592 = vmatpush2.msra.mxu0 0.0
    %593 = vmatprep.subr.mxu0 0.0
    %594 = vmatpush2.msra.mxu0 0.0
    %595 = vmatprep.subr.mxu0 0.0
    %596 = vmatpush2.msra.mxu0 0.0
    %597 = vmatprep.subr.mxu0 0.0
    %598 = vmatpush2.msra.mxu0 0.0
    %599 = vmatprep.subr.mxu0 0.0
    %600 = vmatpush2.msra.mxu0 0.0
    %601 = vmatprep.subr.mxu0 0.0
    %602 = vmatpush2.msra.mxu0 0.0
    %603 = vmatprep.subr.mxu0 0.0
    %604 = vmatpush2.msra.mxu0 0.0
    %605 = vmatprep.subr.mxu0 0.0
    %606 = vmatpush2.msra.mxu0 0.0
    %607 = vmatprep.subr.mxu0 0.0
    %608 = vmatpush2.msra.mxu0 0.0
    %609 = vmatprep.subr.mxu0 0.0
    %610 = vmatpush2.msra.mxu0 0.0
    %611 = vmatprep.subr.mxu0 0.0
    %612 = vmatpush2.msra.mxu0 0.0
    %613 = vmatprep.subr.mxu0 0.0
    %614 = vmatpush2.msra.mxu0 0.0
    %615 = vmatprep.subr.mxu0 0.0
    %616 = vmatpush2.msra.mxu0 0.0
    %617 = vmatprep.mubr.f32.mxu0 0.0
    %618 = vmatmul.mubr.f32.gmra.mxu0 %v551
    %v619 = vpop.f32.mrf.mxu0
    %v620 = vadd.f32 0.0, %v619
    %v621 = vpop.f32.mrf.mxu0
    %622 = vdwg.mxu0
    %v623 = vadd.f32 %v544, %v620
    %v624 = vxor.u32 %v623, 2147483648
    %v625 = vmul.f32 %v624, 1.442695
    %v626 = vpow.pop %v625
    %v627 = vadd.f32 %v626, 1.0
    %v628 = vrcp.pop %v627
    %v629 = vmul.f32 1.0, %v628
    %v630 = vtanh.pop %v623
    %v631 = vld [vmem:[#allocation5] sm:$0xff]
    %633 = vrot.lane.b32.xlu0 %v631, 32
    %v634 = vpop.permute.xlu0 %633
    %v636 = vmul.f32 %v629, %v634
    %638 = vrot.lane.b32.xlu0 %v630, 64
    %v639 = vpop.permute.xlu0 %638
    %v641 = vmul.f32 %v629, %v639
    %643 = vrot.lane.b32.xlu0 %v641, 32
    %v644 = vpop.permute.xlu0 %643
    %v646 = vadd.f32 %v636, %v644
    %v647 = vtanh.pop %v646
    %649 = vrot.lane.b32.xlu0 %v647, 64
    %v650 = vpop.permute.xlu0 %649
    %v652 = vmul.f32 %v629, %v650
    %654 = vrot.lane.b32.xlu0 %v646, 96
    %v655 = vpop.permute.xlu0 %654
    %657 = vst.msk [vmem:[#allocation5] sm:$0xff] %vm176, %v655
    %659 = vrot.lane.b32.xlu0 %v652, 32
    %v660 = vpop.permute.xlu0 %659
    %662 = vst.msk [vmem:[#allocation4] sm:$0xff] %vm176, %v660
    %s663 = scalar_lea.vmem [#allocation3], 24
    %664 = vst.msk [vmem:[%s663] sm:$0xff] %vm176, %v660
    %s665 = scalar_lea.vmem [#allocation2], 32
    %v666 = vld [vmem:[%s665] sm:$0xff]
    %v667 = vld [vmem:[#allocation4] sm:$0xff]
    %v668 = vld [vmem:[%s2] sm:$0xff]
    %v669 = vld [vmem:[%s2 + $0x8] sm:$0xff]
    %v670 = vld [vmem:[%s2 + $0x10] sm:$0xff]
    %v671 = vld [vmem:[%s2 + $0x18] sm:$0xff]
    %v673 = vsel %vm176, %v667, 0
    %675 = vmatprep.subr.mxu0 0.0
    %676 = vmatpush1.msra.mxu0 0.0
    %677 = vmatprep.subr.mxu0 0.0
    %678 = vmatpush1.msra.mxu0 0.0
    %679 = vmatprep.subr.mxu0 0.0
    %680 = vmatpush1.msra.mxu0 0.0
    %681 = vmatprep.subr.mxu0 0.0
    %682 = vmatpush1.msra.mxu0 0.0
    %683 = vmatprep.subr.mxu0 0.0
    %684 = vmatpush1.msra.mxu0 0.0
    %685 = vmatprep.subr.mxu0 0.0
    %686 = vmatpush1.msra.mxu0 0.0
    %687 = vmatprep.subr.mxu0 0.0
    %688 = vmatpush1.msra.mxu0 0.0
    %689 = vmatprep.subr.mxu0 0.0
    %690 = vmatpush1.msra.mxu0 0.0
    %691 = vmatprep.subr.mxu0 0.0
    %692 = vmatpush1.msra.mxu0 0.0
    %693 = vmatprep.subr.mxu0 0.0
    %694 = vmatpush1.msra.mxu0 0.0
    %695 = vmatprep.subr.mxu0 0.0
    %696 = vmatpush1.msra.mxu0 0.0
    %697 = vmatprep.subr.mxu0 0.0
    %698 = vmatpush1.msra.mxu0 0.0
    %699 = vmatprep.subr.mxu0 0.0
    %700 = vmatpush1.msra.mxu0 %v671
    %701 = vmatprep.subr.mxu0 0.0
    %702 = vmatpush1.msra.mxu0 %v670
    %703 = vmatprep.subr.mxu0 0.0
    %704 = vmatpush1.msra.mxu0 %v669
    %705 = vmatprep.subr.mxu0 0.0
    %706 = vmatpush1.msra.mxu0 %v668
    %707 = vmatprep.subr.mxu0 0.0
    %708 = vmatpush2.msra.mxu0 0.0
    %709 = vmatprep.subr.mxu0 0.0
    %710 = vmatpush2.msra.mxu0 0.0
    %711 = vmatprep.subr.mxu0 0.0
    %712 = vmatpush2.msra.mxu0 0.0
    %713 = vmatprep.subr.mxu0 0.0
    %714 = vmatpush2.msra.mxu0 0.0
    %715 = vmatprep.subr.mxu0 0.0
    %716 = vmatpush2.msra.mxu0 0.0
    %717 = vmatprep.subr.mxu0 0.0
    %718 = vmatpush2.msra.mxu0 0.0
    %719 = vmatprep.subr.mxu0 0.0
    %720 = vmatpush2.msra.mxu0 0.0
    %721 = vmatprep.subr.mxu0 0.0
    %722 = vmatpush2.msra.mxu0 0.0
    %723 = vmatprep.subr.mxu0 0.0
    %724 = vmatpush2.msra.mxu0 0.0
    %725 = vmatprep.subr.mxu0 0.0
    %726 = vmatpush2.msra.mxu0 0.0
    %727 = vmatprep.subr.mxu0 0.0
    %728 = vmatpush2.msra.mxu0 0.0
    %729 = vmatprep.subr.mxu0 0.0
    %730 = vmatpush2.msra.mxu0 0.0
    %731 = vmatprep.subr.mxu0 0.0
    %732 = vmatpush2.msra.mxu0 0.0
    %733 = vmatprep.subr.mxu0 0.0
    %734 = vmatpush2.msra.mxu0 0.0
    %735 = vmatprep.subr.mxu0 0.0
    %736 = vmatpush2.msra.mxu0 0.0
    %737 = vmatprep.subr.mxu0 0.0
    %738 = vmatpush2.msra.mxu0 0.0
    %739 = vmatprep.mubr.f32.mxu0 0.0
    %740 = vmatmul.mubr.f32.gmra.mxu0 %v673
    %v741 = vpop.f32.mrf.mxu0
    %v742 = vadd.f32 0.0, %v741
    %v743 = vpop.f32.mrf.mxu0
    %744 = vdwg.mxu0
    %v745 = vadd.f32 %v666, %v742
    %v746 = vxor.u32 %v745, 2147483648
    %v747 = vmul.f32 %v746, 1.442695
    %v748 = vpow.pop %v747
    %v749 = vadd.f32 %v748, 1.0
    %v750 = vrcp.pop %v749
    %v751 = vmul.f32 1.0, %v750
    %v752 = vtanh.pop %v745
    %v753 = vld [vmem:[#allocation5] sm:$0xff]
    %755 = vrot.lane.b32.xlu0 %v753, 32
    %v756 = vpop.permute.xlu0 %755
    %v758 = vmul.f32 %v751, %v756
    %760 = vrot.lane.b32.xlu0 %v752, 64
    %v761 = vpop.permute.xlu0 %760
    %v763 = vmul.f32 %v751, %v761
    %765 = vrot.lane.b32.xlu0 %v763, 32
    %v766 = vpop.permute.xlu0 %765
    %v768 = vadd.f32 %v758, %v766
    %v769 = vtanh.pop %v768
    %771 = vrot.lane.b32.xlu0 %v769, 64
    %v772 = vpop.permute.xlu0 %771
    %v774 = vmul.f32 %v751, %v772
    %776 = vrot.lane.b32.xlu0 %v768, 96
    %v777 = vpop.permute.xlu0 %776
    %779 = vst.msk [vmem:[#allocation5] sm:$0xff] %vm176, %v777
    %781 = vrot.lane.b32.xlu0 %v774, 32
    %v782 = vpop.permute.xlu0 %781
    %784 = vst.msk [vmem:[#allocation4] sm:$0xff] %vm176, %v782
    %s785 = scalar_lea.vmem [#allocation3], 32
    %786 = vst.msk [vmem:[%s785] sm:$0xff] %vm176, %v782
    %s787 = scalar_lea.vmem [#allocation2], 40
    %v788 = vld [vmem:[%s787] sm:$0xff]
    %v789 = vld [vmem:[#allocation4] sm:$0xff]
    %v790 = vld [vmem:[%s2] sm:$0xff]
    %v791 = vld [vmem:[%s2 + $0x8] sm:$0xff]
    %v792 = vld [vmem:[%s2 + $0x10] sm:$0xff]
    %v793 = vld [vmem:[%s2 + $0x18] sm:$0xff]
    %v795 = vsel %vm176, %v789, 0
    %797 = vmatprep.subr.mxu0 0.0
    %798 = vmatpush1.msra.mxu0 0.0
    %799 = vmatprep.subr.mxu0 0.0
    %800 = vmatpush1.msra.mxu0 0.0
    %801 = vmatprep.subr.mxu0 0.0
    %802 = vmatpush1.msra.mxu0 0.0
    %803 = vmatprep.subr.mxu0 0.0
    %804 = vmatpush1.msra.mxu0 0.0
    %805 = vmatprep.subr.mxu0 0.0
    %806 = vmatpush1.msra.mxu0 0.0
    %807 = vmatprep.subr.mxu0 0.0
    %808 = vmatpush1.msra.mxu0 0.0
    %809 = vmatprep.subr.mxu0 0.0
    %810 = vmatpush1.msra.mxu0 0.0
    %811 = vmatprep.subr.mxu0 0.0
    %812 = vmatpush1.msra.mxu0 0.0
    %813 = vmatprep.subr.mxu0 0.0
    %814 = vmatpush1.msra.mxu0 0.0
    %815 = vmatprep.subr.mxu0 0.0
    %816 = vmatpush1.msra.mxu0 0.0
    %817 = vmatprep.subr.mxu0 0.0
    %818 = vmatpush1.msra.mxu0 0.0
    %819 = vmatprep.subr.mxu0 0.0
    %820 = vmatpush1.msra.mxu0 0.0
    %821 = vmatprep.subr.mxu0 0.0
    %822 = vmatpush1.msra.mxu0 %v793
    %823 = vmatprep.subr.mxu0 0.0
    %824 = vmatpush1.msra.mxu0 %v792
    %825 = vmatprep.subr.mxu0 0.0
    %826 = vmatpush1.msra.mxu0 %v791
    %827 = vmatprep.subr.mxu0 0.0
    %828 = vmatpush1.msra.mxu0 %v790
    %829 = vmatprep.subr.mxu0 0.0
    %830 = vmatpush2.msra.mxu0 0.0
    %831 = vmatprep.subr.mxu0 0.0
    %832 = vmatpush2.msra.mxu0 0.0
    %833 = vmatprep.subr.mxu0 0.0
    %834 = vmatpush2.msra.mxu0 0.0
    %835 = vmatprep.subr.mxu0 0.0
    %836 = vmatpush2.msra.mxu0 0.0
    %837 = vmatprep.subr.mxu0 0.0
    %838 = vmatpush2.msra.mxu0 0.0
    %839 = vmatprep.subr.mxu0 0.0
    %840 = vmatpush2.msra.mxu0 0.0
    %841 = vmatprep.subr.mxu0 0.0
    %842 = vmatpush2.msra.mxu0 0.0
    %843 = vmatprep.subr.mxu0 0.0
    %844 = vmatpush2.msra.mxu0 0.0
    %845 = vmatprep.subr.mxu0 0.0
    %846 = vmatpush2.msra.mxu0 0.0
    %847 = vmatprep.subr.mxu0 0.0
    %848 = vmatpush2.msra.mxu0 0.0
    %849 = vmatprep.subr.mxu0 0.0
    %850 = vmatpush2.msra.mxu0 0.0
    %851 = vmatprep.subr.mxu0 0.0
    %852 = vmatpush2.msra.mxu0 0.0
    %853 = vmatprep.subr.mxu0 0.0
    %854 = vmatpush2.msra.mxu0 0.0
    %855 = vmatprep.subr.mxu0 0.0
    %856 = vmatpush2.msra.mxu0 0.0
    %857 = vmatprep.subr.mxu0 0.0
    %858 = vmatpush2.msra.mxu0 0.0
    %859 = vmatprep.subr.mxu0 0.0
    %860 = vmatpush2.msra.mxu0 0.0
    %861 = vmatprep.mubr.f32.mxu0 0.0
    %862 = vmatmul.mubr.f32.gmra.mxu0 %v795
    %v863 = vpop.f32.mrf.mxu0
    %v864 = vadd.f32 0.0, %v863
    %v865 = vpop.f32.mrf.mxu0
    %866 = vdwg.mxu0
    %v867 = vadd.f32 %v788, %v864
    %v868 = vxor.u32 %v867, 2147483648
    %v869 = vmul.f32 %v868, 1.442695
    %v870 = vpow.pop %v869
    %v871 = vadd.f32 %v870, 1.0
    %v872 = vrcp.pop %v871
    %v873 = vmul.f32 1.0, %v872
    %v874 = vtanh.pop %v867
    %v875 = vld [vmem:[#allocation5] sm:$0xff]
    %877 = vrot.lane.b32.xlu0 %v875, 32
    %v878 = vpop.permute.xlu0 %877
    %v880 = vmul.f32 %v873, %v878
    %882 = vrot.lane.b32.xlu0 %v874, 64
    %v883 = vpop.permute.xlu0 %882
    %v885 = vmul.f32 %v873, %v883
    %887 = vrot.lane.b32.xlu0 %v885, 32
    %v888 = vpop.permute.xlu0 %887
    %v890 = vadd.f32 %v880, %v888
    %v891 = vtanh.pop %v890
    %893 = vrot.lane.b32.xlu0 %v891, 64
    %v894 = vpop.permute.xlu0 %893
    %v896 = vmul.f32 %v873, %v894
    %898 = vrot.lane.b32.xlu0 %v890, 96
    %v899 = vpop.permute.xlu0 %898
    %901 = vst.msk [vmem:[#allocation5] sm:$0xff] %vm176, %v899
    %903 = vrot.lane.b32.xlu0 %v896, 32
    %v904 = vpop.permute.xlu0 %903
    %906 = vst.msk [vmem:[#allocation4] sm:$0xff] %vm176, %v904
    %s907 = scalar_lea.vmem [#allocation3], 40
    %908 = vst.msk [vmem:[%s907] sm:$0xff] %vm176, %v904
    %s909 = scalar_lea.vmem [#allocation2], 48
    %v910 = vld [vmem:[%s909] sm:$0xff]
    %v911 = vld [vmem:[#allocation4] sm:$0xff]
    %v912 = vld [vmem:[%s2] sm:$0xff]
    %v913 = vld [vmem:[%s2 + $0x8] sm:$0xff]
    %v914 = vld [vmem:[%s2 + $0x10] sm:$0xff]
    %v915 = vld [vmem:[%s2 + $0x18] sm:$0xff]
    %v917 = vsel %vm176, %v911, 0
    %919 = vmatprep.subr.mxu0 0.0
    %920 = vmatpush1.msra.mxu0 0.0
    %921 = vmatprep.subr.mxu0 0.0
    %922 = vmatpush1.msra.mxu0 0.0
    %923 = vmatprep.subr.mxu0 0.0
    %924 = vmatpush1.msra.mxu0 0.0
    %925 = vmatprep.subr.mxu0 0.0
    %926 = vmatpush1.msra.mxu0 0.0
    %927 = vmatprep.subr.mxu0 0.0
    %928 = vmatpush1.msra.mxu0 0.0
    %929 = vmatprep.subr.mxu0 0.0
    %930 = vmatpush1.msra.mxu0 0.0
    %931 = vmatprep.subr.mxu0 0.0
    %932 = vmatpush1.msra.mxu0 0.0
    %933 = vmatprep.subr.mxu0 0.0
    %934 = vmatpush1.msra.mxu0 0.0
    %935 = vmatprep.subr.mxu0 0.0
    %936 = vmatpush1.msra.mxu0 0.0
    %937 = vmatprep.subr.mxu0 0.0
    %938 = vmatpush1.msra.mxu0 0.0
    %939 = vmatprep.subr.mxu0 0.0
    %940 = vmatpush1.msra.mxu0 0.0
    %941 = vmatprep.subr.mxu0 0.0
    %942 = vmatpush1.msra.mxu0 0.0
    %943 = vmatprep.subr.mxu0 0.0
    %944 = vmatpush1.msra.mxu0 %v915
    %945 = vmatprep.subr.mxu0 0.0
    %946 = vmatpush1.msra.mxu0 %v914
    %947 = vmatprep.subr.mxu0 0.0
    %948 = vmatpush1.msra.mxu0 %v913
    %949 = vmatprep.subr.mxu0 0.0
    %950 = vmatpush1.msra.mxu0 %v912
    %951 = vmatprep.subr.mxu0 0.0
    %952 = vmatpush2.msra.mxu0 0.0
    %953 = vmatprep.subr.mxu0 0.0
    %954 = vmatpush2.msra.mxu0 0.0
    %955 = vmatprep.subr.mxu0 0.0
    %956 = vmatpush2.msra.mxu0 0.0
    %957 = vmatprep.subr.mxu0 0.0
    %958 = vmatpush2.msra.mxu0 0.0
    %959 = vmatprep.subr.mxu0 0.0
    %960 = vmatpush2.msra.mxu0 0.0
    %961 = vmatprep.subr.mxu0 0.0
    %962 = vmatpush2.msra.mxu0 0.0
    %963 = vmatprep.subr.mxu0 0.0
    %964 = vmatpush2.msra.mxu0 0.0
    %965 = vmatprep.subr.mxu0 0.0
    %966 = vmatpush2.msra.mxu0 0.0
    %967 = vmatprep.subr.mxu0 0.0
    %968 = vmatpush2.msra.mxu0 0.0
    %969 = vmatprep.subr.mxu0 0.0
    %970 = vmatpush2.msra.mxu0 0.0
    %971 = vmatprep.subr.mxu0 0.0
    %972 = vmatpush2.msra.mxu0 0.0
    %973 = vmatprep.subr.mxu0 0.0
    %974 = vmatpush2.msra.mxu0 0.0
    %975 = vmatprep.subr.mxu0 0.0
    %976 = vmatpush2.msra.mxu0 0.0
    %977 = vmatprep.subr.mxu0 0.0
    %978 = vmatpush2.msra.mxu0 0.0
    %979 = vmatprep.subr.mxu0 0.0
    %980 = vmatpush2.msra.mxu0 0.0
    %981 = vmatprep.subr.mxu0 0.0
    %982 = vmatpush2.msra.mxu0 0.0
    %983 = vmatprep.mubr.f32.mxu0 0.0
    %984 = vmatmul.mubr.f32.gmra.mxu0 %v917
    %v985 = vpop.f32.mrf.mxu0
    %v986 = vadd.f32 0.0, %v985
    %v987 = vpop.f32.mrf.mxu0
    %988 = vdwg.mxu0
    %v989 = vadd.f32 %v910, %v986
    %v990 = vxor.u32 %v989, 2147483648
    %v991 = vmul.f32 %v990, 1.442695
    %v992 = vpow.pop %v991
    %v993 = vadd.f32 %v992, 1.0
    %v994 = vrcp.pop %v993
    %v995 = vmul.f32 1.0, %v994
    %v996 = vtanh.pop %v989
    %v997 = vld [vmem:[#allocation5] sm:$0xff]
    %999 = vrot.lane.b32.xlu0 %v997, 32
    %v1000 = vpop.permute.xlu0 %999
    %v1002 = vmul.f32 %v995, %v1000
    %1004 = vrot.lane.b32.xlu0 %v996, 64
    %v1005 = vpop.permute.xlu0 %1004
    %v1007 = vmul.f32 %v995, %v1005
    %1009 = vrot.lane.b32.xlu0 %v1007, 32
    %v1010 = vpop.permute.xlu0 %1009
    %v1012 = vadd.f32 %v1002, %v1010
    %v1013 = vtanh.pop %v1012
    %1015 = vrot.lane.b32.xlu0 %v1013, 64
    %v1016 = vpop.permute.xlu0 %1015
    %v1018 = vmul.f32 %v995, %v1016
    %1020 = vrot.lane.b32.xlu0 %v1012, 96
    %v1021 = vpop.permute.xlu0 %1020
    %1023 = vst.msk [vmem:[#allocation5] sm:$0xff] %vm176, %v1021
    %1025 = vrot.lane.b32.xlu0 %v1018, 32
    %v1026 = vpop.permute.xlu0 %1025
    %1028 = vst.msk [vmem:[#allocation4] sm:$0xff] %vm176, %v1026
    %s1029 = scalar_lea.vmem [#allocation3], 48
    %1030 = vst.msk [vmem:[%s1029] sm:$0xff] %vm176, %v1026
    %s1031 = scalar_lea.vmem [#allocation2], 56
    %v1032 = vld [vmem:[%s1031] sm:$0xff]
    %v1033 = vld [vmem:[#allocation4] sm:$0xff]
    %v1034 = vld [vmem:[%s2] sm:$0xff]
    %v1035 = vld [vmem:[%s2 + $0x8] sm:$0xff]
    %v1036 = vld [vmem:[%s2 + $0x10] sm:$0xff]
    %v1037 = vld [vmem:[%s2 + $0x18] sm:$0xff]
    %v1039 = vsel %vm176, %v1033, 0
    %1041 = vmatprep.subr.mxu0 0.0
    %1042 = vmatpush1.msra.mxu0 0.0
    %1043 = vmatprep.subr.mxu0 0.0
    %1044 = vmatpush1.msra.mxu0 0.0
    %1045 = vmatprep.subr.mxu0 0.0
    %1046 = vmatpush1.msra.mxu0 0.0
    %1047 = vmatprep.subr.mxu0 0.0
    %1048 = vmatpush1.msra.mxu0 0.0
    %1049 = vmatprep.subr.mxu0 0.0
    %1050 = vmatpush1.msra.mxu0 0.0
    %1051 = vmatprep.subr.mxu0 0.0
    %1052 = vmatpush1.msra.mxu0 0.0
    %1053 = vmatprep.subr.mxu0 0.0
    %1054 = vmatpush1.msra.mxu0 0.0
    %1055 = vmatprep.subr.mxu0 0.0
    %1056 = vmatpush1.msra.mxu0 0.0
    %1057 = vmatprep.subr.mxu0 0.0
    %1058 = vmatpush1.msra.mxu0 0.0
    %1059 = vmatprep.subr.mxu0 0.0
    %1060 = vmatpush1.msra.mxu0 0.0
    %1061 = vmatprep.subr.mxu0 0.0
    %1062 = vmatpush1.msra.mxu0 0.0
    %1063 = vmatprep.subr.mxu0 0.0
    %1064 = vmatpush1.msra.mxu0 0.0
    %1065 = vmatprep.subr.mxu0 0.0
    %1066 = vmatpush1.msra.mxu0 %v1037
    %1067 = vmatprep.subr.mxu0 0.0
    %1068 = vmatpush1.msra.mxu0 %v1036
    %1069 = vmatprep.subr.mxu0 0.0
    %1070 = vmatpush1.msra.mxu0 %v1035
    %1071 = vmatprep.subr.mxu0 0.0
    %1072 = vmatpush1.msra.mxu0 %v1034
    %1073 = vmatprep.subr.mxu0 0.0
    %1074 = vmatpush2.msra.mxu0 0.0
    %1075 = vmatprep.subr.mxu0 0.0
    %1076 = vmatpush2.msra.mxu0 0.0
    %1077 = vmatprep.subr.mxu0 0.0
    %1078 = vmatpush2.msra.mxu0 0.0
    %1079 = vmatprep.subr.mxu0 0.0
    %1080 = vmatpush2.msra.mxu0 0.0
    %1081 = vmatprep.subr.mxu0 0.0
    %1082 = vmatpush2.msra.mxu0 0.0
    %1083 = vmatprep.subr.mxu0 0.0
    %1084 = vmatpush2.msra.mxu0 0.0
    %1085 = vmatprep.subr.mxu0 0.0
    %1086 = vmatpush2.msra.mxu0 0.0
    %1087 = vmatprep.subr.mxu0 0.0
    %1088 = vmatpush2.msra.mxu0 0.0
    %1089 = vmatprep.subr.mxu0 0.0
    %1090 = vmatpush2.msra.mxu0 0.0
    %1091 = vmatprep.subr.mxu0 0.0
    %1092 = vmatpush2.msra.mxu0 0.0
    %1093 = vmatprep.subr.mxu0 0.0
    %1094 = vmatpush2.msra.mxu0 0.0
    %1095 = vmatprep.subr.mxu0 0.0
    %1096 = vmatpush2.msra.mxu0 0.0
    %1097 = vmatprep.subr.mxu0 0.0
    %1098 = vmatpush2.msra.mxu0 0.0
    %1099 = vmatprep.subr.mxu0 0.0
    %1100 = vmatpush2.msra.mxu0 0.0
    %1101 = vmatprep.subr.mxu0 0.0
    %1102 = vmatpush2.msra.mxu0 0.0
    %1103 = vmatprep.subr.mxu0 0.0
    %1104 = vmatpush2.msra.mxu0 0.0
    %1105 = vmatprep.mubr.f32.mxu0 0.0
    %1106 = vmatmul.mubr.f32.gmra.mxu0 %v1039
    %v1107 = vpop.f32.mrf.mxu0
    %v1108 = vadd.f32 0.0, %v1107
    %v1109 = vpop.f32.mrf.mxu0
    %1110 = vdwg.mxu0
    %v1111 = vadd.f32 %v1032, %v1108
    %v1112 = vxor.u32 %v1111, 2147483648
    %v1113 = vmul.f32 %v1112, 1.442695
    %v1114 = vpow.pop %v1113
    %v1115 = vadd.f32 %v1114, 1.0
    %v1116 = vrcp.pop %v1115
    %v1117 = vmul.f32 1.0, %v1116
    %v1118 = vtanh.pop %v1111
    %v1119 = vld [vmem:[#allocation5] sm:$0xff]
    %1121 = vrot.lane.b32.xlu0 %v1119, 32
    %v1122 = vpop.permute.xlu0 %1121
    %v1124 = vmul.f32 %v1117, %v1122
    %1126 = vrot.lane.b32.xlu0 %v1118, 64
    %v1127 = vpop.permute.xlu0 %1126
    %v1129 = vmul.f32 %v1117, %v1127
    %1131 = vrot.lane.b32.xlu0 %v1129, 32
    %v1132 = vpop.permute.xlu0 %1131
    %v1134 = vadd.f32 %v1124, %v1132
    %v1135 = vtanh.pop %v1134
    %1137 = vrot.lane.b32.xlu0 %v1135, 64
    %v1138 = vpop.permute.xlu0 %1137
    %v1140 = vmul.f32 %v1117, %v1138
    %1142 = vrot.lane.b32.xlu0 %v1134, 96
    %v1143 = vpop.permute.xlu0 %1142
    %1145 = vst.msk [vmem:[#allocation5] sm:$0xff] %vm176, %v1143
    %1147 = vrot.lane.b32.xlu0 %v1140, 32
    %v1148 = vpop.permute.xlu0 %1147
    %1150 = vst.msk [vmem:[#allocation4] sm:$0xff] %vm176, %v1148
    %s1151 = scalar_lea.vmem [#allocation3], 56
    %1152 = vst.msk [vmem:[%s1151] sm:$0xff] %vm176, %v1148
    %v1153 = vld [vmem:[#allocation3] sm:$0xff]
    %v1154 = vld [vmem:[#allocation3 + $0x8] sm:$0xff]
    %v1155 = vld [vmem:[#allocation3 + $0x10] sm:$0xff]
    %v1156 = vld [vmem:[#allocation3 + $0x18] sm:$0xff]
    %v1157 = vld [vmem:[#allocation3 + $0x20] sm:$0xff]
    %v1158 = vld [vmem:[#allocation3 + $0x28] sm:$0xff]
    %v1159 = vld [vmem:[#allocation3 + $0x30] sm:$0xff]
    %v1160 = vld [vmem:[#allocation3 + $0x38] sm:$0xff]
    %v1161 = vld [vmem:[%s4] sm:$0xff]
    %v1162 = vld [vmem:[%s4 + $0x8] sm:$0xff]
    %v1163 = vld [vmem:[%s4 + $0x10] sm:$0xff]
    %v1164 = vld [vmem:[%s4 + $0x18] sm:$0xff]
    %v1166 = vsel %vm176, %v1153, 0
    %v1169 = vsel %vm176, %v1154, 0
    %v1172 = vsel %vm176, %v1155, 0
    %v1175 = vsel %vm176, %v1156, 0
    %v1178 = vsel %vm176, %v1157, 0
    %v1181 = vsel %vm176, %v1158, 0
    %v1184 = vsel %vm176, %v1159, 0
    %v1187 = vsel %vm176, %v1160, 0
    %1189 = vmatprep.subr.mxu0 0.0
    %1190 = vmatpush1.msra.mxu0 0.0
    %1191 = vmatprep.subr.mxu0 0.0
    %1192 = vmatpush1.msra.mxu0 0.0
    %1193 = vmatprep.subr.mxu0 0.0
    %1194 = vmatpush1.msra.mxu0 0.0
    %1195 = vmatprep.subr.mxu0 0.0
    %1196 = vmatpush1.msra.mxu0 0.0
    %1197 = vmatprep.subr.mxu0 0.0
    %1198 = vmatpush1.msra.mxu0 0.0
    %1199 = vmatprep.subr.mxu0 0.0
    %1200 = vmatpush1.msra.mxu0 0.0
    %1201 = vmatprep.subr.mxu0 0.0
    %1202 = vmatpush1.msra.mxu0 0.0
    %1203 = vmatprep.subr.mxu0 0.0
    %1204 = vmatpush1.msra.mxu0 0.0
    %1205 = vmatprep.subr.mxu0 0.0
    %1206 = vmatpush1.msra.mxu0 0.0
    %1207 = vmatprep.subr.mxu0 0.0
    %1208 = vmatpush1.msra.mxu0 0.0
    %1209 = vmatprep.subr.mxu0 0.0
    %1210 = vmatpush1.msra.mxu0 0.0
    %1211 = vmatprep.subr.mxu0 0.0
    %1212 = vmatpush1.msra.mxu0 0.0
    %1213 = vmatprep.subr.mxu0 0.0
    %1214 = vmatpush1.msra.mxu0 %v1164
    %1215 = vmatprep.subr.mxu0 0.0
    %1216 = vmatpush1.msra.mxu0 %v1163
    %1217 = vmatprep.subr.mxu0 0.0
    %1218 = vmatpush1.msra.mxu0 %v1162
    %1219 = vmatprep.subr.mxu0 0.0
    %1220 = vmatpush1.msra.mxu0 %v1161
    %1221 = vmatprep.subr.mxu0 0.0
    %1222 = vmatpush2.msra.mxu0 0.0
    %1223 = vmatprep.subr.mxu0 0.0
    %1224 = vmatpush2.msra.mxu0 0.0
    %1225 = vmatprep.subr.mxu0 0.0
    %1226 = vmatpush2.msra.mxu0 0.0
    %1227 = vmatprep.subr.mxu0 0.0
    %1228 = vmatpush2.msra.mxu0 0.0
    %1229 = vmatprep.subr.mxu0 0.0
    %1230 = vmatpush2.msra.mxu0 0.0
    %1231 = vmatprep.subr.mxu0 0.0
    %1232 = vmatpush2.msra.mxu0 0.0
    %1233 = vmatprep.subr.mxu0 0.0
    %1234 = vmatpush2.msra.mxu0 0.0
    %1235 = vmatprep.subr.mxu0 0.0
    %1236 = vmatpush2.msra.mxu0 0.0
    %1237 = vmatprep.subr.mxu0 0.0
    %1238 = vmatpush2.msra.mxu0 0.0
    %1239 = vmatprep.subr.mxu0 0.0
    %1240 = vmatpush2.msra.mxu0 0.0
    %1241 = vmatprep.subr.mxu0 0.0
    %1242 = vmatpush2.msra.mxu0 0.0
    %1243 = vmatprep.subr.mxu0 0.0
    %1244 = vmatpush2.msra.mxu0 0.0
    %1245 = vmatprep.subr.mxu0 0.0
    %1246 = vmatpush2.msra.mxu0 0.0
    %1247 = vmatprep.subr.mxu0 0.0
    %1248 = vmatpush2.msra.mxu0 0.0
    %1249 = vmatprep.subr.mxu0 0.0
    %1250 = vmatpush2.msra.mxu0 0.0
    %1251 = vmatprep.subr.mxu0 0.0
    %1252 = vmatpush2.msra.mxu0 0.0
    %1253 = vmatprep.mubr.f32.mxu0 0.0
    %1254 = vmatmul.mubr.f32.gmra.mxu0 %v1166
    %v1255 = vpop.f32.mrf.mxu0
    %v1256 = vadd.f32 0.0, %v1255
    %v1257 = vpop.f32.mrf.mxu0
    %1258 = vmatprep.mubr.f32.mxu0 0.0
    %1259 = vmatmul.mubr.f32.gmra.mxu0 %v1169
    %v1260 = vpop.f32.mrf.mxu0
    %v1261 = vadd.f32 0.0, %v1260
    %v1262 = vpop.f32.mrf.mxu0
    %1263 = vmatprep.mubr.f32.mxu0 0.0
    %1264 = vmatmul.mubr.f32.gmra.mxu0 %v1172
    %v1265 = vpop.f32.mrf.mxu0
    %v1266 = vadd.f32 0.0, %v1265
    %v1267 = vpop.f32.mrf.mxu0
    %1268 = vmatprep.mubr.f32.mxu0 0.0
    %1269 = vmatmul.mubr.f32.gmra.mxu0 %v1175
    %v1270 = vpop.f32.mrf.mxu0
    %v1271 = vadd.f32 0.0, %v1270
    %v1272 = vpop.f32.mrf.mxu0
    %1273 = vmatprep.mubr.f32.mxu0 0.0
    %1274 = vmatmul.mubr.f32.gmra.mxu0 %v1178
    %v1275 = vpop.f32.mrf.mxu0
    %v1276 = vadd.f32 0.0, %v1275
    %v1277 = vpop.f32.mrf.mxu0
    %1278 = vmatprep.mubr.f32.mxu0 0.0
    %1279 = vmatmul.mubr.f32.gmra.mxu0 %v1181
    %v1280 = vpop.f32.mrf.mxu0
    %v1281 = vadd.f32 0.0, %v1280
    %v1282 = vpop.f32.mrf.mxu0
    %1283 = vmatprep.mubr.f32.mxu0 0.0
    %1284 = vmatmul.mubr.f32.gmra.mxu0 %v1184
    %v1285 = vpop.f32.mrf.mxu0
    %v1286 = vadd.f32 0.0, %v1285
    %v1287 = vpop.f32.mrf.mxu0
    %1288 = vmatprep.mubr.f32.mxu0 0.0
    %1289 = vmatmul.mubr.f32.gmra.mxu0 %v1187
    %v1290 = vpop.f32.mrf.mxu0
    %v1291 = vadd.f32 0.0, %v1290
    %v1292 = vpop.f32.mrf.mxu0
    %1293 = vdwg.mxu0
    %1294 = vst [vmem:[#allocation6] sm:$0xff] %v1256
    %1295 = vst [vmem:[#allocation6 + $0x8] sm:$0xff] %v1261
    %1296 = vst [vmem:[#allocation6 + $0x10] sm:$0xff] %v1266
    %1297 = vst [vmem:[#allocation6 + $0x18] sm:$0xff] %v1271
    %1298 = vst [vmem:[#allocation6 + $0x20] sm:$0xff] %v1276
    %1299 = vst [vmem:[#allocation6 + $0x28] sm:$0xff] %v1281
    %1300 = vst [vmem:[#allocation6 + $0x30] sm:$0xff] %v1286
    %1301 = vst [vmem:[#allocation6 + $0x38] sm:$0xff] %v1291
    // Predicated region
    $region22: #{tpu_custom_call.1} parent=1 // pred_check
      _
    $region23: #{tpu_custom_call.1} parent=1 // pred_check_branch
      %1303 = sbr.rel (0) target = $region25
    $region24: #{tpu_custom_call.1} parent=1 // pred_region
      %s1305 = ssub.s32 1024, 1024
      %1306 = vsyncadd [#allocation7], %s1305
      %s1307 = sshll.u32 [#allocation6], 4
      %s1308 = int_to_ptr.vmem [resolvable:$true] %s1307
      %1313 = dma.vmem_to_hbm [thread:$0]  %s1308, 1024, %s5, [#allocation7], 128, 128, 8
    $region25: #{tpu_custom_call.1} parent=1 // pred_fallthru
      _
    // Predicated region
    $region26: #{tpu_custom_call.1} parent=1 // pred_check
      _
    $region27: #{tpu_custom_call.1} parent=1 // pred_check_branch
      %1315 = sbr.rel (0) target = $region29
    $region28: #{tpu_custom_call.1} parent=1 // pred_region
      %1316 = dma.done [#allocation7], 1024
    $region29: #{tpu_custom_call.1} parent=1 // pred_fallthru
      _
    %1317 = vsyncpa [#allocation7], 1

</llo_original>
